<compile_context>
chip_gen: v6e
topology: v6e:2x2x1
jax: 0.10.0
libtpu: 0.0.40
codegen_flags: <defaults>
</compile_context>

<pallas_src>
import functools

import jax
import jax.numpy as jnp
from jax import lax
from jax.experimental import pallas as pl
from jax.experimental.pallas import tpu as pltpu


# --------------------------------------------------------------------------- #
# shift helpers
# --------------------------------------------------------------------------- #

def _shift_zero(a, axis, d):
    """out[..., i, ...] = a[..., i + d, ...] along `axis`, zero-filled at the
    boundary (static int d).  Used for the T (leading-dim) and H (sublane)
    taps; the W (lane) taps use the cheaper XLU roll below."""
    if d == 0:
        return a
    size = a.shape[axis]
    pad_shape = list(a.shape)
    pad_shape[axis] = abs(d)
    zeros = jnp.zeros(pad_shape, a.dtype)
    if d > 0:
        kept = lax.slice_in_dim(a, d, size, axis=axis)
        return jnp.concatenate([kept, zeros], axis=axis)
    kept = lax.slice_in_dim(a, 0, size + d, axis=axis)
    return jnp.concatenate([zeros, kept], axis=axis)


@functools.lru_cache(maxsize=None)
def _roll_direction():
    """Pin pltpu.roll's rotation convention with a one-off micro kernel.

    Returns +1 if pltpu.roll matches jnp.roll (out[i] = x[i - shift]), -1 for
    the opposite convention, and 0 if lane rolls are unavailable (the lane
    taps then fall back to slice+concat, which is always correct)."""
    try:
        def k(x_ref, o_ref):
            o_ref[...] = pltpu.roll(x_ref[...], 3, 2)

        x = jnp.arange(2 * 8 * 128, dtype=jnp.float32).reshape(2, 8, 128)
        y = pl.pallas_call(
            k, out_shape=jax.ShapeDtypeStruct(x.shape, x.dtype))(x)
        y = jax.block_until_ready(y)
        if bool(jnp.array_equal(y, jnp.roll(x, 3, axis=2))):
            return 1
        if bool(jnp.array_equal(y, jnp.roll(x, -3, axis=2))):
            return -1
        return 0
    except Exception:
        return 0


def _lane_shift_zero(a, d, keep_mask, roll_sign):
    """out[..., i] = a[..., i + d] on the minor (lane) axis, zero-filled.

    Uses an XLU rotation (pltpu.roll) plus a hoisted boundary mask - the XLU
    slot is otherwise idle in this kernel, so the 27-count inner tap shifts are
    near-free (perf-review item 2).  Falls back to slice+concat if rolls are
    unavailable on this jax version."""
    if d == 0:
        return a
    if roll_sign == 0:
        return _shift_zero(a, a.ndim - 1, d)
    n = a.shape[-1]
    rolled = pltpu.roll(a, (-roll_sign * d) % n, a.ndim - 1)
    return jnp.where(keep_mask, rolled, 0.0)


# --------------------------------------------------------------------------- #
# fused stage kernel
# --------------------------------------------------------------------------- #

def _bottleneck_block(x, w1, b1, taps, bd, w2, b2, masks, *, dims, roll_sign):
    """One X3D bottleneck + residual + ReLU on an in-register (T, H, W*C) tile."""
    T, H, W, C, Cmid, f = dims
    Wc, Wcm = W * C, W * Cmid
    rows = T * H * (W // f)
    mask_wm, mask_wp = masks          # valid-lane masks for the dw = -1 / +1 taps

    # conv_a: 1x1x1 pointwise as one MXU matmul over the (capped) lane fold.
    # TODO(synk): cast the matmul operands to bf16 on large-C stages (item 8).
    h = jnp.dot(x.reshape(rows, f * C), w1, preferred_element_type=jnp.float32)
    h3 = jnp.maximum(h + b1, 0.0).reshape(T, H, Wcm)

    # conv_b: 3x3x3 depthwise, stride 1, pad 1.  All 27 taps accumulate in
    # registers (no VMEM scratch, no per-tap read-modify-write stores); the
    # bias is pre-loaded into the accumulator and ReLU is fused at readout.
    acc = jnp.broadcast_to(bd.reshape(1, 1, Wcm), (T, H, Wcm))
    for dt in (-1, 0, 1):                       # T taps: leading-dim shifts (3)
        ht = _shift_zero(h3, 0, dt)
        for dh in (-1, 0, 1):                   # H taps: sublane shifts    (9)
            g = _shift_zero(ht, 1, dh)
            for dw in (-1, 0, 1):               # W taps: lane rolls       (27)
                gw = _lane_shift_zero(g, dw * Cmid,
                                      mask_wp if dw > 0 else mask_wm,
                                      roll_sign)
                k = (dt + 1) * 9 + (dh + 1) * 3 + (dw + 1)
                acc = acc + gw * taps[k]
    hd = jnp.maximum(acc, 0.0)

    # conv_c: 1x1x1 pointwise + residual add + ReLU.
    y = jnp.dot(hd.reshape(rows, f * Cmid), w2,
                preferred_element_type=jnp.float32) + b2
    return jnp.maximum(x + y.reshape(T, H, Wc), 0.0)


def res_stage_kernel(x_ref, w1_ref, b1_ref, dw_ref, bd_ref, w2_ref, b2_ref,
                     o_ref, *, dims, nblk, roll_sign):
    """All ResBlocks of the stage, fused, on one (lane-folded) sample tile.

    x_ref  : (1, T, H, W*C)          activation tile (W, C folded into lanes)
    w1_ref : (nblk, f*C,    f*Cmid)  conv_a weights, kron(I_f, w1)
    b1_ref : (nblk, 1,      f*Cmid)  conv_a biases, tiled over f
    dw_ref : (nblk, 27,     W*Cmid)  conv_b taps, (dt,dh,dw)-major, tiled over W
    bd_ref : (nblk, 1,      W*Cmid)  conv_b biases
    w2_ref : (nblk, f*Cmid, f*C)     conv_c weights, kron(I_f, w2)
    b2_ref : (nblk, 1,      f*C)     conv_c biases
    o_ref  : (1, T, H, W*C)
    """
    T, H, W, C, Cmid, f = dims
    Wcm = W * Cmid

    x = x_ref[0].astype(jnp.float32)                       # (T, H, W*C)

    # Lane-boundary masks for the +-1 W taps, hoisted once and shared by every
    # tap of every block (invalidate the rolled-around lanes).
    lane = lax.broadcasted_iota(jnp.int32, (T, H, Wcm), 2)
    masks = (lane >= Cmid, lane < (Wcm - Cmid))            # (dw=-1, dw=+1)

    for blk in range(nblk):    # static unroll: activation never leaves VMEM
        x = _bottleneck_block(x, w1_ref[blk], b1_ref[blk], dw_ref[blk],
                              bd_ref[blk], w2_ref[blk], b2_ref[blk], masks,
                              dims=dims, roll_sign=roll_sign)

    o_ref[0] = x.astype(o_ref.dtype)


# --------------------------------------------------------------------------- #
# host-side folding & pallas_call wrapper
# --------------------------------------------------------------------------- #

def _vmem_capacity_bytes():
    """Physical VMEM of the attached TPU (128 MiB on v5e/v6e, 64 MiB per core
    on v7x); conservative 64 MiB fallback if the query is unavailable."""
    try:
        return int(pltpu.get_tpu_info().vmem_capacity_bytes)
    except Exception:
        return 64 * 2 ** 20


def _fold_stage_params(params, w_extent, fold_cap=None):
    """Repack every block's weights for the lane-folded (..., W*C) layout.

    The pointwise convs become block-diagonal kron(I_f, w) matmuls.  The fold
    factor f is capped near the MXU width (256 lanes) instead of the full W
    (perf-review item 3): large-C stages would otherwise carry O(W^2) zero
    blocks through VMEM and the MXU.  The depthwise taps / biases stay tiled
    over the full W because the activation lane layout keeps W fully folded.
    """
    w1s, b1s, dws, bds, w2s, b2s = params
    nblk, c, cmid = w1s.shape
    f = fold_cap if fold_cap is not None else max(1, 256 // c)
    f = max(1, min(int(w_extent), int(f)))
    while w_extent % f:                     # keep f a divisor of W
        f -= 1
    eye = jnp.eye(f, dtype=w1s.dtype)
    w1f = jnp.stack([jnp.kron(eye, w1s[b]) for b in range(nblk)])   # (nblk,fC,fCmid)
    w2f = jnp.stack([jnp.kron(eye, w2s[b]) for b in range(nblk)])   # (nblk,fCmid,fC)
    b1f = jnp.tile(b1s.reshape(nblk, 1, cmid), (1, 1, f))           # (nblk,1,fCmid)
    b2f = jnp.tile(b2s.reshape(nblk, 1, c), (1, 1, f))              # (nblk,1,fC)
    bdf = jnp.tile(bds.reshape(nblk, 1, cmid), (1, 1, w_extent))    # (nblk,1,WCmid)
    dwf = jnp.tile(dws.reshape(nblk, 27, cmid), (1, 1, w_extent))   # (nblk,27,WCmid)
    return (w1f, b1f, dwf, bdf, w2f, b2f), cmid, f


def _res_stage_call(x, folded, *, dims, nblk):
    """x: (N, T, H, W*C) lane-folded activations.  One pallas_call runs the
    whole stage so the activation round-trips HBM exactly once."""
    n, t, h, wc = x.shape
    _, _, W, _, Cmid, _ = dims
    wcm = W * Cmid

    # VMEM budget (perf-review item 12): double-buffered in/out activation
    # tiles, (double-buffered) resident weights, and the per-block register /
    # temporary working set (x, h3, acc plus a few shift temporaries at
    # (T, H, W*Cmid) f32).  Clamped below the physical VMEM of the chip.
    act = 4 * t * h * wc
    mid = 4 * t * h * wcm
    weights = sum(4 * a.size for a in folded)
    est = 4 * act + 2 * weights + 2 * act + 8 * mid
    vmem_limit = int(min(0.85 * _vmem_capacity_bytes(),
                         max(32 * 2 ** 20, 2 * est)))
    # TODO(synk): for very large per-sample tiles (late v7x stages) tile T in
    # the grid with a +-1 halo instead of clamping (perf-review item 4).

    kernel = functools.partial(res_stage_kernel, dims=dims, nblk=nblk,
                               roll_sign=_roll_direction())
    act_spec = pl.BlockSpec((1, t, h, wc), lambda i: (i, 0, 0, 0))

    def wspec(a):   # full array, constant index_map -> DMA'd once, VMEM-resident
        # TODO(synk): pipeline_mode=pl.Buffered(1) would single-buffer these
        # constant blocks and halve their VMEM footprint (perf-review item 9).
        zeros = (0,) * a.ndim
        return pl.BlockSpec(a.shape, lambda i: zeros)

    return pl.pallas_call(
        kernel,
        grid=(n,),
        in_specs=[act_spec] + [wspec(a) for a in folded],
        out_specs=act_spec,
        out_shape=jax.ShapeDtypeStruct(x.shape, x.dtype),
        input_output_aliases={0: 0},              # reuse the activation buffer
        compiler_params=pltpu.CompilerParams(
            dimension_semantics=("parallel",),    # batch splits over v7x's 2 TCs
            vmem_limit_bytes=vmem_limit,
        ),
    )(x, *folded)


@functools.partial(jax.jit, static_argnames=("fold_cap",))
def res_stage_pallas(x_ncthw, params, fold_cap=None):
    """x_ncthw: (N, C, T, H, W) float32 (PyTorch NCTHW layout).  Applies every
    ResBlock of the stage in ONE fused Pallas kernel; returns the same layout.
    `fold_cap` optionally overrides the pointwise kron fold factor."""
    w1s = params[0]
    n, c, t, h, w = x_ncthw.shape
    nblk = w1s.shape[0]

    # One layout change for the whole stage: channels-last, then fold W and C
    # into the minor (lane) axis.  Best when H % 8 == 0 (sublane aligned).
    # TODO(synk): keep the surrounding model channels-last end-to-end to drop
    # this transpose round-trip (perf-review item 11).
    # TODO(synk): when W*C < 128, additionally fold H rows into the lane axis
    # for lane-dense stores (perf-review item 7).
    x = jnp.transpose(x_ncthw, (0, 2, 3, 4, 1)).reshape(n, t, h, w * c)

    folded, cmid, f = _fold_stage_params(params, w, fold_cap)
    x = _res_stage_call(x, folded, dims=(t, h, w, c, cmid, f), nblk=nblk)

    return jnp.transpose(x.reshape(n, t, h, w, c), (0, 4, 1, 2, 3))


def res_block_pallas(x_ncthw, block_params, fold_cap=None):
    """Single ResBlock (the spec module): identity shortcut, X3D bottleneck
    branch2, summation branch_fusion, ReLU activation."""
    return res_stage_pallas(x_ncthw, tuple(p[None] for p in block_params),
                            fold_cap=fold_cap)


# --------------------------------------------------------------------------- #
# pure-JAX reference
# --------------------------------------------------------------------------- #

def res_stage_reference(x, params):
    """Pure-JAX reference (lax.conv_general_dilated), PyTorch NCTHW layout."""
    w1s, b1s, dws, bds, w2s, b2s = params
    nblk = w1s.shape[0]
    cmid = w1s.shape[2]
    for blk in range(nblk):
        h = jnp.einsum('ncthw,cd->ndthw', x, w1s[blk]) \
            + b1s[blk].reshape(1, cmid, 1, 1, 1)
        h = jax.nn.relu(h)
        dw = jnp.transpose(dws[blk], (3, 0, 1, 2))[:, None]       # (Cmid,1,3,3,3)
        hd = lax.conv_general_dilated(
            h, dw, window_strides=(1, 1, 1), padding='SAME',
            feature_group_count=cmid,
            dimension_numbers=('NCDHW', 'OIDHW', 'NCDHW'))
        hd = jax.nn.relu(hd + bds[blk].reshape(1, cmid, 1, 1, 1))
        y = jnp.einsum('ndthw,dc->ncthw', hd, w2s[blk]) \
            + b2s[blk].reshape(1, -1, 1, 1, 1)
        x = jax.nn.relu(x + y)
    return x


if __name__ == "__main__":
    # Small shapes consistent with an X3D stage input (N, C, T, H, W).
    N, C, T, H, W = 2, 4, 4, 8, 8
    Cmid = 8          # bottleneck expansion
    nblk = 2          # number of ResBlocks in the stage

    key = jax.random.PRNGKey(0)
    ks = jax.random.split(key, 7)
    x = jax.random.normal(ks[0], (N, C, T, H, W), jnp.float32)

    params = (
        0.3 * jax.random.normal(ks[1], (nblk, C, Cmid), jnp.float32),        # w1
        0.1 * jax.random.normal(ks[2], (nblk, 1, Cmid), jnp.float32),        # b1
        0.2 * jax.random.normal(ks[3], (nblk, 3, 3, 3, Cmid), jnp.float32),  # dw
        0.1 * jax.random.normal(ks[4], (nblk, 1, Cmid), jnp.float32),        # bd
        0.3 * jax.random.normal(ks[5], (nblk, Cmid, C), jnp.float32),        # w2
        0.1 * jax.random.normal(ks[6], (nblk, 1, C), jnp.float32),           # b2
    )

    ref_stage = jax.block_until_ready(res_stage_reference(x, params))

    # Whole stage, default fold (f == W at these small channel counts).
    out = jax.block_until_ready(res_stage_pallas(x, params))
    assert out.shape == x.shape and out.dtype == x.dtype
    assert jnp.allclose(out, ref_stage, atol=1e-3, rtol=1e-3), \
        f"stage max abs err {jnp.max(jnp.abs(out - ref_stage))}"

    # Whole stage with a capped kron fold (exercises the f < W pointwise path).
    out_c = jax.block_until_ready(res_stage_pallas(x, params, fold_cap=2))
    assert jnp.allclose(out_c, ref_stage, atol=1e-3, rtol=1e-3), \
        f"capped-fold max abs err {jnp.max(jnp.abs(out_c - ref_stage))}"

    # Single ResBlock (the spec module itself).
    blk_params = tuple(p[0] for p in params)
    ref_blk = res_stage_reference(x, tuple(p[:1] for p in params))
    out_blk = jax.block_until_ready(res_block_pallas(x, blk_params))
    assert jnp.allclose(out_blk, ref_blk, atol=1e-3, rtol=1e-3), \
        f"block max abs err {jnp.max(jnp.abs(out_blk - ref_blk))}"

    print("KERNEL_OK")
</pallas_src>

<mosaic_0001>
module attributes {stable_mosaic.version = 11 : i64} {
  func.func @res_stage_kernel(%arg0: i32, %arg1: memref<1x4x8x32xf32, #tpu.memory_space<vmem>>, %arg2: memref<2x32x64xf32, #tpu.memory_space<vmem>>, %arg3: memref<2x1x64xf32, #tpu.memory_space<vmem>>, %arg4: memref<2x27x64xf32, #tpu.memory_space<vmem>>, %arg5: memref<2x1x64xf32, #tpu.memory_space<vmem>>, %arg6: memref<2x64x32xf32, #tpu.memory_space<vmem>>, %arg7: memref<2x1x32xf32, #tpu.memory_space<vmem>>, %arg8: memref<1x4x8x32xf32, #tpu.memory_space<vmem>>) attributes {dimension_semantics = [#tpu.dimension_semantics<parallel>], iteration_bounds = array<i64: 2>, scalar_prefetch = 0 : i64, scratch_operands = 0 : i64, tpu.core_type = #tpu.core_type<tc>, window_params = [{transform_indices = @transform_0, window_bounds = array<i64: 1, 4, 8, 32>}, {pipeline_mode = #tpu.pipeline_mode<synchronous>, transform_indices = @transform_1, window_bounds = array<i64: 2, 32, 64>}, {pipeline_mode = #tpu.pipeline_mode<synchronous>, transform_indices = @transform_2, window_bounds = array<i64: 2, 1, 64>}, {pipeline_mode = #tpu.pipeline_mode<synchronous>, transform_indices = @transform_3, window_bounds = array<i64: 2, 27, 64>}, {pipeline_mode = #tpu.pipeline_mode<synchronous>, transform_indices = @transform_4, window_bounds = array<i64: 2, 1, 64>}, {pipeline_mode = #tpu.pipeline_mode<synchronous>, transform_indices = @transform_5, window_bounds = array<i64: 2, 64, 32>}, {pipeline_mode = #tpu.pipeline_mode<synchronous>, transform_indices = @transform_6, window_bounds = array<i64: 2, 1, 32>}, {transform_indices = @transform_7, window_bounds = array<i64: 1, 4, 8, 32>}]} {
    %c0 = arith.constant 0 : index
    %c0_0 = arith.constant 0 : index
    %c0_1 = arith.constant 0 : index
    %c0_2 = arith.constant 0 : index
    %0 = vector.load %arg1[%c0, %c0_0, %c0_1, %c0_2] : memref<1x4x8x32xf32, #tpu.memory_space<vmem>>, vector<1x4x8x32xf32>
    %1 = vector.shape_cast %0 : vector<1x4x8x32xf32> to vector<4x8x32xf32>
    %c0_3 = arith.constant 0 : index
    %c0_4 = arith.constant 0 : index
    %c0_5 = arith.constant 0 : index
    %2 = vector.load %arg2[%c0_3, %c0_4, %c0_5] : memref<2x32x64xf32, #tpu.memory_space<vmem>>, vector<1x32x64xf32>
    %3 = vector.shape_cast %2 : vector<1x32x64xf32> to vector<32x64xf32>
    %c0_6 = arith.constant 0 : index
    %c0_7 = arith.constant 0 : index
    %c0_8 = arith.constant 0 : index
    %4 = vector.load %arg3[%c0_6, %c0_7, %c0_8] : memref<2x1x64xf32, #tpu.memory_space<vmem>>, vector<1x1x64xf32>
    %5 = vector.shape_cast %4 : vector<1x1x64xf32> to vector<1x64xf32>
    %c0_9 = arith.constant 0 : index
    %c0_10 = arith.constant 0 : index
    %c0_11 = arith.constant 0 : index
    %6 = vector.load %arg4[%c0_9, %c0_10, %c0_11] : memref<2x27x64xf32, #tpu.memory_space<vmem>>, vector<1x27x64xf32>
    %7 = vector.shape_cast %6 : vector<1x27x64xf32> to vector<27x64xf32>
    %c0_12 = arith.constant 0 : index
    %c0_13 = arith.constant 0 : index
    %c0_14 = arith.constant 0 : index
    %8 = vector.load %arg5[%c0_12, %c0_13, %c0_14] : memref<2x1x64xf32, #tpu.memory_space<vmem>>, vector<1x1x64xf32>
    %9 = vector.shape_cast %8 : vector<1x1x64xf32> to vector<1x64xf32>
    %c0_15 = arith.constant 0 : index
    %c0_16 = arith.constant 0 : index
    %c0_17 = arith.constant 0 : index
    %10 = vector.load %arg6[%c0_15, %c0_16, %c0_17] : memref<2x64x32xf32, #tpu.memory_space<vmem>>, vector<1x64x32xf32>
    %11 = vector.shape_cast %10 : vector<1x64x32xf32> to vector<64x32xf32>
    %c0_18 = arith.constant 0 : index
    %c0_19 = arith.constant 0 : index
    %c0_20 = arith.constant 0 : index
    %12 = vector.load %arg7[%c0_18, %c0_19, %c0_20] : memref<2x1x32xf32, #tpu.memory_space<vmem>>, vector<1x1x32xf32>
    %13 = vector.shape_cast %12 : vector<1x1x32xf32> to vector<1x32xf32>
    %14 = vector.shape_cast %1 : vector<4x8x32xf32> to vector<32x32xf32>
    %cst = arith.constant dense<0.000000e+00> : vector<32x64xf32>
    %15 = tpu.matmul %14, %3, %cst {dimension_numbers = #tpu.dot_dimension_numbers<[1], [0], [0], [1], [0, 0, 1, 1], [], []>} : vector<32x32xf32>, vector<32x64xf32>, vector<32x64xf32> -> vector<32x64xf32>
    %16 = vector.broadcast %5 : vector<1x64xf32> to vector<32x64xf32>
    %17 = arith.addf %15, %16 : vector<32x64xf32>
    %cst_21 = arith.constant 0.000000e+00 : f32
    %18 = vector.broadcast %cst_21 : f32 to vector<32x64xf32>
    %19 = arith.maximumf %17, %18 : vector<32x64xf32>
    %20 = vector.shape_cast %19 : vector<32x64xf32> to vector<4x8x64xf32>
    %21 = vector.shape_cast %9 : vector<1x64xf32> to vector<1x1x64xf32>
    %22 = vector.shape_cast %21 : vector<1x1x64xf32> to vector<1x1x64xf32>
    %23 = vector.broadcast %22 : vector<1x1x64xf32> to vector<4x8x64xf32>
    %cst_22 = arith.constant 0.000000e+00 : f32
    %24 = vector.broadcast %cst_22 : f32 to vector<1x8x64xf32>
    %25 = vector.extract_strided_slice %20 {offsets = [0, 0, 0], sizes = [3, 8, 64], strides = [1, 1, 1]} : vector<4x8x64xf32> to vector<3x8x64xf32>
    %26 = tpu.concatenate %24, %25 in 0 : vector<1x8x64xf32>, vector<3x8x64xf32> -> vector<4x8x64xf32>
    %cst_23 = arith.constant 0.000000e+00 : f32
    %27 = vector.broadcast %cst_23 : f32 to vector<4x1x64xf32>
    %28 = vector.extract_strided_slice %26 {offsets = [0, 0, 0], sizes = [4, 7, 64], strides = [1, 1, 1]} : vector<4x8x64xf32> to vector<4x7x64xf32>
    %29 = tpu.concatenate %27, %28 in 1 : vector<4x1x64xf32>, vector<4x7x64xf32> -> vector<4x8x64xf32>
    %cst_24 = arith.constant 0.000000e+00 : f32
    %30 = vector.broadcast %cst_24 : f32 to vector<4x8x8xf32>
    %31 = vector.extract_strided_slice %29 {offsets = [0, 0, 0], sizes = [4, 8, 56], strides = [1, 1, 1]} : vector<4x8x64xf32> to vector<4x8x56xf32>
    %32 = tpu.concatenate %30, %31 in 2 : vector<4x8x8xf32>, vector<4x8x56xf32> -> vector<4x8x64xf32>
    %33 = vector.extract_strided_slice %7 {offsets = [0, 0], sizes = [1, 64], strides = [1, 1]} : vector<27x64xf32> to vector<1x64xf32>
    %34 = vector.shape_cast %33 : vector<1x64xf32> to vector<64xf32>
    %35 = vector.shape_cast %34 : vector<64xf32> to vector<1x1x64xf32>
    %36 = vector.broadcast %35 : vector<1x1x64xf32> to vector<4x8x64xf32>
    %37 = arith.mulf %32, %36 : vector<4x8x64xf32>
    %38 = arith.addf %23, %37 : vector<4x8x64xf32>
    %39 = vector.extract_strided_slice %7 {offsets = [1, 0], sizes = [1, 64], strides = [1, 1]} : vector<27x64xf32> to vector<1x64xf32>
    %40 = vector.shape_cast %39 : vector<1x64xf32> to vector<64xf32>
    %41 = vector.shape_cast %40 : vector<64xf32> to vector<1x1x64xf32>
    %42 = vector.broadcast %41 : vector<1x1x64xf32> to vector<4x8x64xf32>
    %43 = arith.mulf %29, %42 : vector<4x8x64xf32>
    %44 = arith.addf %38, %43 : vector<4x8x64xf32>
    %cst_25 = arith.constant 0.000000e+00 : f32
    %45 = vector.broadcast %cst_25 : f32 to vector<4x8x8xf32>
    %46 = vector.extract_strided_slice %29 {offsets = [0, 0, 8], sizes = [4, 8, 56], strides = [1, 1, 1]} : vector<4x8x64xf32> to vector<4x8x56xf32>
    %47 = tpu.concatenate %46, %45 in 2 : vector<4x8x56xf32>, vector<4x8x8xf32> -> vector<4x8x64xf32>
    %48 = vector.extract_strided_slice %7 {offsets = [2, 0], sizes = [1, 64], strides = [1, 1]} : vector<27x64xf32> to vector<1x64xf32>
    %49 = vector.shape_cast %48 : vector<1x64xf32> to vector<64xf32>
    %50 = vector.shape_cast %49 : vector<64xf32> to vector<1x1x64xf32>
    %51 = vector.broadcast %50 : vector<1x1x64xf32> to vector<4x8x64xf32>
    %52 = arith.mulf %47, %51 : vector<4x8x64xf32>
    %53 = arith.addf %44, %52 : vector<4x8x64xf32>
    %cst_26 = arith.constant 0.000000e+00 : f32
    %54 = vector.broadcast %cst_26 : f32 to vector<4x8x8xf32>
    %55 = vector.extract_strided_slice %26 {offsets = [0, 0, 0], sizes = [4, 8, 56], strides = [1, 1, 1]} : vector<4x8x64xf32> to vector<4x8x56xf32>
    %56 = tpu.concatenate %54, %55 in 2 : vector<4x8x8xf32>, vector<4x8x56xf32> -> vector<4x8x64xf32>
    %57 = vector.extract_strided_slice %7 {offsets = [3, 0], sizes = [1, 64], strides = [1, 1]} : vector<27x64xf32> to vector<1x64xf32>
    %58 = vector.shape_cast %57 : vector<1x64xf32> to vector<64xf32>
    %59 = vector.shape_cast %58 : vector<64xf32> to vector<1x1x64xf32>
    %60 = vector.broadcast %59 : vector<1x1x64xf32> to vector<4x8x64xf32>
    %61 = arith.mulf %56, %60 : vector<4x8x64xf32>
    %62 = arith.addf %53, %61 : vector<4x8x64xf32>
    %63 = vector.extract_strided_slice %7 {offsets = [4, 0], sizes = [1, 64], strides = [1, 1]} : vector<27x64xf32> to vector<1x64xf32>
    %64 = vector.shape_cast %63 : vector<1x64xf32> to vector<64xf32>
    %65 = vector.shape_cast %64 : vector<64xf32> to vector<1x1x64xf32>
    %66 = vector.broadcast %65 : vector<1x1x64xf32> to vector<4x8x64xf32>
    %67 = arith.mulf %26, %66 : vector<4x8x64xf32>
    %68 = arith.addf %62, %67 : vector<4x8x64xf32>
    %cst_27 = arith.constant 0.000000e+00 : f32
    %69 = vector.broadcast %cst_27 : f32 to vector<4x8x8xf32>
    %70 = vector.extract_strided_slice %26 {offsets = [0, 0, 8], sizes = [4, 8, 56], strides = [1, 1, 1]} : vector<4x8x64xf32> to vector<4x8x56xf32>
    %71 = tpu.concatenate %70, %69 in 2 : vector<4x8x56xf32>, vector<4x8x8xf32> -> vector<4x8x64xf32>
    %72 = vector.extract_strided_slice %7 {offsets = [5, 0], sizes = [1, 64], strides = [1, 1]} : vector<27x64xf32> to vector<1x64xf32>
    %73 = vector.shape_cast %72 : vector<1x64xf32> to vector<64xf32>
    %74 = vector.shape_cast %73 : vector<64xf32> to vector<1x1x64xf32>
    %75 = vector.broadcast %74 : vector<1x1x64xf32> to vector<4x8x64xf32>
    %76 = arith.mulf %71, %75 : vector<4x8x64xf32>
    %77 = arith.addf %68, %76 : vector<4x8x64xf32>
    %cst_28 = arith.constant 0.000000e+00 : f32
    %78 = vector.broadcast %cst_28 : f32 to vector<4x1x64xf32>
    %79 = vector.extract_strided_slice %26 {offsets = [0, 1, 0], sizes = [4, 7, 64], strides = [1, 1, 1]} : vector<4x8x64xf32> to vector<4x7x64xf32>
    %80 = tpu.concatenate %79, %78 in 1 : vector<4x7x64xf32>, vector<4x1x64xf32> -> vector<4x8x64xf32>
    %cst_29 = arith.constant 0.000000e+00 : f32
    %81 = vector.broadcast %cst_29 : f32 to vector<4x8x8xf32>
    %82 = vector.extract_strided_slice %80 {offsets = [0, 0, 0], sizes = [4, 8, 56], strides = [1, 1, 1]} : vector<4x8x64xf32> to vector<4x8x56xf32>
    %83 = tpu.concatenate %81, %82 in 2 : vector<4x8x8xf32>, vector<4x8x56xf32> -> vector<4x8x64xf32>
    %84 = vector.extract_strided_slice %7 {offsets = [6, 0], sizes = [1, 64], strides = [1, 1]} : vector<27x64xf32> to vector<1x64xf32>
    %85 = vector.shape_cast %84 : vector<1x64xf32> to vector<64xf32>
    %86 = vector.shape_cast %85 : vector<64xf32> to vector<1x1x64xf32>
    %87 = vector.broadcast %86 : vector<1x1x64xf32> to vector<4x8x64xf32>
    %88 = arith.mulf %83, %87 : vector<4x8x64xf32>
    %89 = arith.addf %77, %88 : vector<4x8x64xf32>
    %90 = vector.extract_strided_slice %7 {offsets = [7, 0], sizes = [1, 64], strides = [1, 1]} : vector<27x64xf32> to vector<1x64xf32>
    %91 = vector.shape_cast %90 : vector<1x64xf32> to vector<64xf32>
    %92 = vector.shape_cast %91 : vector<64xf32> to vector<1x1x64xf32>
    %93 = vector.broadcast %92 : vector<1x1x64xf32> to vector<4x8x64xf32>
    %94 = arith.mulf %80, %93 : vector<4x8x64xf32>
    %95 = arith.addf %89, %94 : vector<4x8x64xf32>
    %cst_30 = arith.constant 0.000000e+00 : f32
    %96 = vector.broadcast %cst_30 : f32 to vector<4x8x8xf32>
    %97 = vector.extract_strided_slice %80 {offsets = [0, 0, 8], sizes = [4, 8, 56], strides = [1, 1, 1]} : vector<4x8x64xf32> to vector<4x8x56xf32>
    %98 = tpu.concatenate %97, %96 in 2 : vector<4x8x56xf32>, vector<4x8x8xf32> -> vector<4x8x64xf32>
    %99 = vector.extract_strided_slice %7 {offsets = [8, 0], sizes = [1, 64], strides = [1, 1]} : vector<27x64xf32> to vector<1x64xf32>
    %100 = vector.shape_cast %99 : vector<1x64xf32> to vector<64xf32>
    %101 = vector.shape_cast %100 : vector<64xf32> to vector<1x1x64xf32>
    %102 = vector.broadcast %101 : vector<1x1x64xf32> to vector<4x8x64xf32>
    %103 = arith.mulf %98, %102 : vector<4x8x64xf32>
    %104 = arith.addf %95, %103 : vector<4x8x64xf32>
    %cst_31 = arith.constant 0.000000e+00 : f32
    %105 = vector.broadcast %cst_31 : f32 to vector<4x1x64xf32>
    %106 = vector.extract_strided_slice %20 {offsets = [0, 0, 0], sizes = [4, 7, 64], strides = [1, 1, 1]} : vector<4x8x64xf32> to vector<4x7x64xf32>
    %107 = tpu.concatenate %105, %106 in 1 : vector<4x1x64xf32>, vector<4x7x64xf32> -> vector<4x8x64xf32>
    %cst_32 = arith.constant 0.000000e+00 : f32
    %108 = vector.broadcast %cst_32 : f32 to vector<4x8x8xf32>
    %109 = vector.extract_strided_slice %107 {offsets = [0, 0, 0], sizes = [4, 8, 56], strides = [1, 1, 1]} : vector<4x8x64xf32> to vector<4x8x56xf32>
    %110 = tpu.concatenate %108, %109 in 2 : vector<4x8x8xf32>, vector<4x8x56xf32> -> vector<4x8x64xf32>
    %111 = vector.extract_strided_slice %7 {offsets = [9, 0], sizes = [1, 64], strides = [1, 1]} : vector<27x64xf32> to vector<1x64xf32>
    %112 = vector.shape_cast %111 : vector<1x64xf32> to vector<64xf32>
    %113 = vector.shape_cast %112 : vector<64xf32> to vector<1x1x64xf32>
    %114 = vector.broadcast %113 : vector<1x1x64xf32> to vector<4x8x64xf32>
    %115 = arith.mulf %110, %114 : vector<4x8x64xf32>
    %116 = arith.addf %104, %115 : vector<4x8x64xf32>
    %117 = vector.extract_strided_slice %7 {offsets = [10, 0], sizes = [1, 64], strides = [1, 1]} : vector<27x64xf32> to vector<1x64xf32>
    %118 = vector.shape_cast %117 : vector<1x64xf32> to vector<64xf32>
    %119 = vector.shape_cast %118 : vector<64xf32> to vector<1x1x64xf32>
    %120 = vector.broadcast %119 : vector<1x1x64xf32> to vector<4x8x64xf32>
    %121 = arith.mulf %107, %120 : vector<4x8x64xf32>
    %122 = arith.addf %116, %121 : vector<4x8x64xf32>
    %cst_33 = arith.constant 0.000000e+00 : f32
    %123 = vector.broadcast %cst_33 : f32 to vector<4x8x8xf32>
    %124 = vector.extract_strided_slice %107 {offsets = [0, 0, 8], sizes = [4, 8, 56], strides = [1, 1, 1]} : vector<4x8x64xf32> to vector<4x8x56xf32>
    %125 = tpu.concatenate %124, %123 in 2 : vector<4x8x56xf32>, vector<4x8x8xf32> -> vector<4x8x64xf32>
    %126 = vector.extract_strided_slice %7 {offsets = [11, 0], sizes = [1, 64], strides = [1, 1]} : vector<27x64xf32> to vector<1x64xf32>
    %127 = vector.shape_cast %126 : vector<1x64xf32> to vector<64xf32>
    %128 = vector.shape_cast %127 : vector<64xf32> to vector<1x1x64xf32>
    %129 = vector.broadcast %128 : vector<1x1x64xf32> to vector<4x8x64xf32>
    %130 = arith.mulf %125, %129 : vector<4x8x64xf32>
    %131 = arith.addf %122, %130 : vector<4x8x64xf32>
    %cst_34 = arith.constant 0.000000e+00 : f32
    %132 = vector.broadcast %cst_34 : f32 to vector<4x8x8xf32>
    %133 = vector.extract_strided_slice %20 {offsets = [0, 0, 0], sizes = [4, 8, 56], strides = [1, 1, 1]} : vector<4x8x64xf32> to vector<4x8x56xf32>
    %134 = tpu.concatenate %132, %133 in 2 : vector<4x8x8xf32>, vector<4x8x56xf32> -> vector<4x8x64xf32>
    %135 = vector.extract_strided_slice %7 {offsets = [12, 0], sizes = [1, 64], strides = [1, 1]} : vector<27x64xf32> to vector<1x64xf32>
    %136 = vector.shape_cast %135 : vector<1x64xf32> to vector<64xf32>
    %137 = vector.shape_cast %136 : vector<64xf32> to vector<1x1x64xf32>
    %138 = vector.broadcast %137 : vector<1x1x64xf32> to vector<4x8x64xf32>
    %139 = arith.mulf %134, %138 : vector<4x8x64xf32>
    %140 = arith.addf %131, %139 : vector<4x8x64xf32>
    %141 = vector.extract_strided_slice %7 {offsets = [13, 0], sizes = [1, 64], strides = [1, 1]} : vector<27x64xf32> to vector<1x64xf32>
    %142 = vector.shape_cast %141 : vector<1x64xf32> to vector<64xf32>
    %143 = vector.shape_cast %142 : vector<64xf32> to vector<1x1x64xf32>
    %144 = vector.broadcast %143 : vector<1x1x64xf32> to vector<4x8x64xf32>
    %145 = arith.mulf %20, %144 : vector<4x8x64xf32>
    %146 = arith.addf %140, %145 : vector<4x8x64xf32>
    %cst_35 = arith.constant 0.000000e+00 : f32
    %147 = vector.broadcast %cst_35 : f32 to vector<4x8x8xf32>
    %148 = vector.extract_strided_slice %20 {offsets = [0, 0, 8], sizes = [4, 8, 56], strides = [1, 1, 1]} : vector<4x8x64xf32> to vector<4x8x56xf32>
    %149 = tpu.concatenate %148, %147 in 2 : vector<4x8x56xf32>, vector<4x8x8xf32> -> vector<4x8x64xf32>
    %150 = vector.extract_strided_slice %7 {offsets = [14, 0], sizes = [1, 64], strides = [1, 1]} : vector<27x64xf32> to vector<1x64xf32>
    %151 = vector.shape_cast %150 : vector<1x64xf32> to vector<64xf32>
    %152 = vector.shape_cast %151 : vector<64xf32> to vector<1x1x64xf32>
    %153 = vector.broadcast %152 : vector<1x1x64xf32> to vector<4x8x64xf32>
    %154 = arith.mulf %149, %153 : vector<4x8x64xf32>
    %155 = arith.addf %146, %154 : vector<4x8x64xf32>
    %cst_36 = arith.constant 0.000000e+00 : f32
    %156 = vector.broadcast %cst_36 : f32 to vector<4x1x64xf32>
    %157 = vector.extract_strided_slice %20 {offsets = [0, 1, 0], sizes = [4, 7, 64], strides = [1, 1, 1]} : vector<4x8x64xf32> to vector<4x7x64xf32>
    %158 = tpu.concatenate %157, %156 in 1 : vector<4x7x64xf32>, vector<4x1x64xf32> -> vector<4x8x64xf32>
    %cst_37 = arith.constant 0.000000e+00 : f32
    %159 = vector.broadcast %cst_37 : f32 to vector<4x8x8xf32>
    %160 = vector.extract_strided_slice %158 {offsets = [0, 0, 0], sizes = [4, 8, 56], strides = [1, 1, 1]} : vector<4x8x64xf32> to vector<4x8x56xf32>
    %161 = tpu.concatenate %159, %160 in 2 : vector<4x8x8xf32>, vector<4x8x56xf32> -> vector<4x8x64xf32>
    %162 = vector.extract_strided_slice %7 {offsets = [15, 0], sizes = [1, 64], strides = [1, 1]} : vector<27x64xf32> to vector<1x64xf32>
    %163 = vector.shape_cast %162 : vector<1x64xf32> to vector<64xf32>
    %164 = vector.shape_cast %163 : vector<64xf32> to vector<1x1x64xf32>
    %165 = vector.broadcast %164 : vector<1x1x64xf32> to vector<4x8x64xf32>
    %166 = arith.mulf %161, %165 : vector<4x8x64xf32>
    %167 = arith.addf %155, %166 : vector<4x8x64xf32>
    %168 = vector.extract_strided_slice %7 {offsets = [16, 0], sizes = [1, 64], strides = [1, 1]} : vector<27x64xf32> to vector<1x64xf32>
    %169 = vector.shape_cast %168 : vector<1x64xf32> to vector<64xf32>
    %170 = vector.shape_cast %169 : vector<64xf32> to vector<1x1x64xf32>
    %171 = vector.broadcast %170 : vector<1x1x64xf32> to vector<4x8x64xf32>
    %172 = arith.mulf %158, %171 : vector<4x8x64xf32>
    %173 = arith.addf %167, %172 : vector<4x8x64xf32>
    %cst_38 = arith.constant 0.000000e+00 : f32
    %174 = vector.broadcast %cst_38 : f32 to vector<4x8x8xf32>
    %175 = vector.extract_strided_slice %158 {offsets = [0, 0, 8], sizes = [4, 8, 56], strides = [1, 1, 1]} : vector<4x8x64xf32> to vector<4x8x56xf32>
    %176 = tpu.concatenate %175, %174 in 2 : vector<4x8x56xf32>, vector<4x8x8xf32> -> vector<4x8x64xf32>
    %177 = vector.extract_strided_slice %7 {offsets = [17, 0], sizes = [1, 64], strides = [1, 1]} : vector<27x64xf32> to vector<1x64xf32>
    %178 = vector.shape_cast %177 : vector<1x64xf32> to vector<64xf32>
    %179 = vector.shape_cast %178 : vector<64xf32> to vector<1x1x64xf32>
    %180 = vector.broadcast %179 : vector<1x1x64xf32> to vector<4x8x64xf32>
    %181 = arith.mulf %176, %180 : vector<4x8x64xf32>
    %182 = arith.addf %173, %181 : vector<4x8x64xf32>
    %cst_39 = arith.constant 0.000000e+00 : f32
    %183 = vector.broadcast %cst_39 : f32 to vector<1x8x64xf32>
    %184 = vector.extract_strided_slice %20 {offsets = [1, 0, 0], sizes = [3, 8, 64], strides = [1, 1, 1]} : vector<4x8x64xf32> to vector<3x8x64xf32>
    %185 = tpu.concatenate %184, %183 in 0 : vector<3x8x64xf32>, vector<1x8x64xf32> -> vector<4x8x64xf32>
    %cst_40 = arith.constant 0.000000e+00 : f32
    %186 = vector.broadcast %cst_40 : f32 to vector<4x1x64xf32>
    %187 = vector.extract_strided_slice %185 {offsets = [0, 0, 0], sizes = [4, 7, 64], strides = [1, 1, 1]} : vector<4x8x64xf32> to vector<4x7x64xf32>
    %188 = tpu.concatenate %186, %187 in 1 : vector<4x1x64xf32>, vector<4x7x64xf32> -> vector<4x8x64xf32>
    %cst_41 = arith.constant 0.000000e+00 : f32
    %189 = vector.broadcast %cst_41 : f32 to vector<4x8x8xf32>
    %190 = vector.extract_strided_slice %188 {offsets = [0, 0, 0], sizes = [4, 8, 56], strides = [1, 1, 1]} : vector<4x8x64xf32> to vector<4x8x56xf32>
    %191 = tpu.concatenate %189, %190 in 2 : vector<4x8x8xf32>, vector<4x8x56xf32> -> vector<4x8x64xf32>
    %192 = vector.extract_strided_slice %7 {offsets = [18, 0], sizes = [1, 64], strides = [1, 1]} : vector<27x64xf32> to vector<1x64xf32>
    %193 = vector.shape_cast %192 : vector<1x64xf32> to vector<64xf32>
    %194 = vector.shape_cast %193 : vector<64xf32> to vector<1x1x64xf32>
    %195 = vector.broadcast %194 : vector<1x1x64xf32> to vector<4x8x64xf32>
    %196 = arith.mulf %191, %195 : vector<4x8x64xf32>
    %197 = arith.addf %182, %196 : vector<4x8x64xf32>
    %198 = vector.extract_strided_slice %7 {offsets = [19, 0], sizes = [1, 64], strides = [1, 1]} : vector<27x64xf32> to vector<1x64xf32>
    %199 = vector.shape_cast %198 : vector<1x64xf32> to vector<64xf32>
    %200 = vector.shape_cast %199 : vector<64xf32> to vector<1x1x64xf32>
    %201 = vector.broadcast %200 : vector<1x1x64xf32> to vector<4x8x64xf32>
    %202 = arith.mulf %188, %201 : vector<4x8x64xf32>
    %203 = arith.addf %197, %202 : vector<4x8x64xf32>
    %cst_42 = arith.constant 0.000000e+00 : f32
    %204 = vector.broadcast %cst_42 : f32 to vector<4x8x8xf32>
    %205 = vector.extract_strided_slice %188 {offsets = [0, 0, 8], sizes = [4, 8, 56], strides = [1, 1, 1]} : vector<4x8x64xf32> to vector<4x8x56xf32>
    %206 = tpu.concatenate %205, %204 in 2 : vector<4x8x56xf32>, vector<4x8x8xf32> -> vector<4x8x64xf32>
    %207 = vector.extract_strided_slice %7 {offsets = [20, 0], sizes = [1, 64], strides = [1, 1]} : vector<27x64xf32> to vector<1x64xf32>
    %208 = vector.shape_cast %207 : vector<1x64xf32> to vector<64xf32>
    %209 = vector.shape_cast %208 : vector<64xf32> to vector<1x1x64xf32>
    %210 = vector.broadcast %209 : vector<1x1x64xf32> to vector<4x8x64xf32>
    %211 = arith.mulf %206, %210 : vector<4x8x64xf32>
    %212 = arith.addf %203, %211 : vector<4x8x64xf32>
    %cst_43 = arith.constant 0.000000e+00 : f32
    %213 = vector.broadcast %cst_43 : f32 to vector<4x8x8xf32>
    %214 = vector.extract_strided_slice %185 {offsets = [0, 0, 0], sizes = [4, 8, 56], strides = [1, 1, 1]} : vector<4x8x64xf32> to vector<4x8x56xf32>
    %215 = tpu.concatenate %213, %214 in 2 : vector<4x8x8xf32>, vector<4x8x56xf32> -> vector<4x8x64xf32>
    %216 = vector.extract_strided_slice %7 {offsets = [21, 0], sizes = [1, 64], strides = [1, 1]} : vector<27x64xf32> to vector<1x64xf32>
    %217 = vector.shape_cast %216 : vector<1x64xf32> to vector<64xf32>
    %218 = vector.shape_cast %217 : vector<64xf32> to vector<1x1x64xf32>
    %219 = vector.broadcast %218 : vector<1x1x64xf32> to vector<4x8x64xf32>
    %220 = arith.mulf %215, %219 : vector<4x8x64xf32>
    %221 = arith.addf %212, %220 : vector<4x8x64xf32>
    %222 = vector.extract_strided_slice %7 {offsets = [22, 0], sizes = [1, 64], strides = [1, 1]} : vector<27x64xf32> to vector<1x64xf32>
    %223 = vector.shape_cast %222 : vector<1x64xf32> to vector<64xf32>
    %224 = vector.shape_cast %223 : vector<64xf32> to vector<1x1x64xf32>
    %225 = vector.broadcast %224 : vector<1x1x64xf32> to vector<4x8x64xf32>
    %226 = arith.mulf %185, %225 : vector<4x8x64xf32>
    %227 = arith.addf %221, %226 : vector<4x8x64xf32>
    %cst_44 = arith.constant 0.000000e+00 : f32
    %228 = vector.broadcast %cst_44 : f32 to vector<4x8x8xf32>
    %229 = vector.extract_strided_slice %185 {offsets = [0, 0, 8], sizes = [4, 8, 56], strides = [1, 1, 1]} : vector<4x8x64xf32> to vector<4x8x56xf32>
    %230 = tpu.concatenate %229, %228 in 2 : vector<4x8x56xf32>, vector<4x8x8xf32> -> vector<4x8x64xf32>
    %231 = vector.extract_strided_slice %7 {offsets = [23, 0], sizes = [1, 64], strides = [1, 1]} : vector<27x64xf32> to vector<1x64xf32>
    %232 = vector.shape_cast %231 : vector<1x64xf32> to vector<64xf32>
    %233 = vector.shape_cast %232 : vector<64xf32> to vector<1x1x64xf32>
    %234 = vector.broadcast %233 : vector<1x1x64xf32> to vector<4x8x64xf32>
    %235 = arith.mulf %230, %234 : vector<4x8x64xf32>
    %236 = arith.addf %227, %235 : vector<4x8x64xf32>
    %cst_45 = arith.constant 0.000000e+00 : f32
    %237 = vector.broadcast %cst_45 : f32 to vector<4x1x64xf32>
    %238 = vector.extract_strided_slice %185 {offsets = [0, 1, 0], sizes = [4, 7, 64], strides = [1, 1, 1]} : vector<4x8x64xf32> to vector<4x7x64xf32>
    %239 = tpu.concatenate %238, %237 in 1 : vector<4x7x64xf32>, vector<4x1x64xf32> -> vector<4x8x64xf32>
    %cst_46 = arith.constant 0.000000e+00 : f32
    %240 = vector.broadcast %cst_46 : f32 to vector<4x8x8xf32>
    %241 = vector.extract_strided_slice %239 {offsets = [0, 0, 0], sizes = [4, 8, 56], strides = [1, 1, 1]} : vector<4x8x64xf32> to vector<4x8x56xf32>
    %242 = tpu.concatenate %240, %241 in 2 : vector<4x8x8xf32>, vector<4x8x56xf32> -> vector<4x8x64xf32>
    %243 = vector.extract_strided_slice %7 {offsets = [24, 0], sizes = [1, 64], strides = [1, 1]} : vector<27x64xf32> to vector<1x64xf32>
    %244 = vector.shape_cast %243 : vector<1x64xf32> to vector<64xf32>
    %245 = vector.shape_cast %244 : vector<64xf32> to vector<1x1x64xf32>
    %246 = vector.broadcast %245 : vector<1x1x64xf32> to vector<4x8x64xf32>
    %247 = arith.mulf %242, %246 : vector<4x8x64xf32>
    %248 = arith.addf %236, %247 : vector<4x8x64xf32>
    %249 = vector.extract_strided_slice %7 {offsets = [25, 0], sizes = [1, 64], strides = [1, 1]} : vector<27x64xf32> to vector<1x64xf32>
    %250 = vector.shape_cast %249 : vector<1x64xf32> to vector<64xf32>
    %251 = vector.shape_cast %250 : vector<64xf32> to vector<1x1x64xf32>
    %252 = vector.broadcast %251 : vector<1x1x64xf32> to vector<4x8x64xf32>
    %253 = arith.mulf %239, %252 : vector<4x8x64xf32>
    %254 = arith.addf %248, %253 : vector<4x8x64xf32>
    %cst_47 = arith.constant 0.000000e+00 : f32
    %255 = vector.broadcast %cst_47 : f32 to vector<4x8x8xf32>
    %256 = vector.extract_strided_slice %239 {offsets = [0, 0, 8], sizes = [4, 8, 56], strides = [1, 1, 1]} : vector<4x8x64xf32> to vector<4x8x56xf32>
    %257 = tpu.concatenate %256, %255 in 2 : vector<4x8x56xf32>, vector<4x8x8xf32> -> vector<4x8x64xf32>
    %258 = vector.extract_strided_slice %7 {offsets = [26, 0], sizes = [1, 64], strides = [1, 1]} : vector<27x64xf32> to vector<1x64xf32>
    %259 = vector.shape_cast %258 : vector<1x64xf32> to vector<64xf32>
    %260 = vector.shape_cast %259 : vector<64xf32> to vector<1x1x64xf32>
    %261 = vector.broadcast %260 : vector<1x1x64xf32> to vector<4x8x64xf32>
    %262 = arith.mulf %257, %261 : vector<4x8x64xf32>
    %263 = arith.addf %254, %262 : vector<4x8x64xf32>
    %cst_48 = arith.constant 0.000000e+00 : f32
    %264 = vector.broadcast %cst_48 : f32 to vector<4x8x64xf32>
    %265 = arith.maximumf %263, %264 : vector<4x8x64xf32>
    %266 = vector.shape_cast %265 : vector<4x8x64xf32> to vector<32x64xf32>
    %cst_49 = arith.constant dense<0.000000e+00> : vector<32x32xf32>
    %267 = tpu.matmul %266, %11, %cst_49 {dimension_numbers = #tpu.dot_dimension_numbers<[1], [0], [0], [1], [0, 0, 1, 1], [], []>} : vector<32x64xf32>, vector<64x32xf32>, vector<32x32xf32> -> vector<32x32xf32>
    %268 = vector.broadcast %13 : vector<1x32xf32> to vector<32x32xf32>
    %269 = arith.addf %267, %268 : vector<32x32xf32>
    %270 = vector.shape_cast %269 : vector<32x32xf32> to vector<4x8x32xf32>
    %271 = arith.addf %1, %270 : vector<4x8x32xf32>
    %cst_50 = arith.constant 0.000000e+00 : f32
    %272 = vector.broadcast %cst_50 : f32 to vector<4x8x32xf32>
    %273 = arith.maximumf %271, %272 : vector<4x8x32xf32>
    %c1 = arith.constant 1 : index
    %c0_51 = arith.constant 0 : index
    %c0_52 = arith.constant 0 : index
    %274 = vector.load %arg2[%c1, %c0_51, %c0_52] : memref<2x32x64xf32, #tpu.memory_space<vmem>>, vector<1x32x64xf32>
    %275 = vector.shape_cast %274 : vector<1x32x64xf32> to vector<32x64xf32>
    %c1_53 = arith.constant 1 : index
    %c0_54 = arith.constant 0 : index
    %c0_55 = arith.constant 0 : index
    %276 = vector.load %arg3[%c1_53, %c0_54, %c0_55] : memref<2x1x64xf32, #tpu.memory_space<vmem>>, vector<1x1x64xf32>
    %277 = vector.shape_cast %276 : vector<1x1x64xf32> to vector<1x64xf32>
    %c1_56 = arith.constant 1 : index
    %c0_57 = arith.constant 0 : index
    %c0_58 = arith.constant 0 : index
    %278 = vector.load %arg4[%c1_56, %c0_57, %c0_58] : memref<2x27x64xf32, #tpu.memory_space<vmem>>, vector<1x27x64xf32>
    %279 = vector.shape_cast %278 : vector<1x27x64xf32> to vector<27x64xf32>
    %c1_59 = arith.constant 1 : index
    %c0_60 = arith.constant 0 : index
    %c0_61 = arith.constant 0 : index
    %280 = vector.load %arg5[%c1_59, %c0_60, %c0_61] : memref<2x1x64xf32, #tpu.memory_space<vmem>>, vector<1x1x64xf32>
    %281 = vector.shape_cast %280 : vector<1x1x64xf32> to vector<1x64xf32>
    %c1_62 = arith.constant 1 : index
    %c0_63 = arith.constant 0 : index
    %c0_64 = arith.constant 0 : index
    %282 = vector.load %arg6[%c1_62, %c0_63, %c0_64] : memref<2x64x32xf32, #tpu.memory_space<vmem>>, vector<1x64x32xf32>
    %283 = vector.shape_cast %282 : vector<1x64x32xf32> to vector<64x32xf32>
    %c1_65 = arith.constant 1 : index
    %c0_66 = arith.constant 0 : index
    %c0_67 = arith.constant 0 : index
    %284 = vector.load %arg7[%c1_65, %c0_66, %c0_67] : memref<2x1x32xf32, #tpu.memory_space<vmem>>, vector<1x1x32xf32>
    %285 = vector.shape_cast %284 : vector<1x1x32xf32> to vector<1x32xf32>
    %286 = vector.shape_cast %273 : vector<4x8x32xf32> to vector<32x32xf32>
    %cst_68 = arith.constant dense<0.000000e+00> : vector<32x64xf32>
    %287 = tpu.matmul %286, %275, %cst_68 {dimension_numbers = #tpu.dot_dimension_numbers<[1], [0], [0], [1], [0, 0, 1, 1], [], []>} : vector<32x32xf32>, vector<32x64xf32>, vector<32x64xf32> -> vector<32x64xf32>
    %288 = vector.broadcast %277 : vector<1x64xf32> to vector<32x64xf32>
    %289 = arith.addf %287, %288 : vector<32x64xf32>
    %cst_69 = arith.constant 0.000000e+00 : f32
    %290 = vector.broadcast %cst_69 : f32 to vector<32x64xf32>
    %291 = arith.maximumf %289, %290 : vector<32x64xf32>
    %292 = vector.shape_cast %291 : vector<32x64xf32> to vector<4x8x64xf32>
    %293 = vector.shape_cast %281 : vector<1x64xf32> to vector<1x1x64xf32>
    %294 = vector.shape_cast %293 : vector<1x1x64xf32> to vector<1x1x64xf32>
    %295 = vector.broadcast %294 : vector<1x1x64xf32> to vector<4x8x64xf32>
    %cst_70 = arith.constant 0.000000e+00 : f32
    %296 = vector.broadcast %cst_70 : f32 to vector<1x8x64xf32>
    %297 = vector.extract_strided_slice %292 {offsets = [0, 0, 0], sizes = [3, 8, 64], strides = [1, 1, 1]} : vector<4x8x64xf32> to vector<3x8x64xf32>
    %298 = tpu.concatenate %296, %297 in 0 : vector<1x8x64xf32>, vector<3x8x64xf32> -> vector<4x8x64xf32>
    %cst_71 = arith.constant 0.000000e+00 : f32
    %299 = vector.broadcast %cst_71 : f32 to vector<4x1x64xf32>
    %300 = vector.extract_strided_slice %298 {offsets = [0, 0, 0], sizes = [4, 7, 64], strides = [1, 1, 1]} : vector<4x8x64xf32> to vector<4x7x64xf32>
    %301 = tpu.concatenate %299, %300 in 1 : vector<4x1x64xf32>, vector<4x7x64xf32> -> vector<4x8x64xf32>
    %cst_72 = arith.constant 0.000000e+00 : f32
    %302 = vector.broadcast %cst_72 : f32 to vector<4x8x8xf32>
    %303 = vector.extract_strided_slice %301 {offsets = [0, 0, 0], sizes = [4, 8, 56], strides = [1, 1, 1]} : vector<4x8x64xf32> to vector<4x8x56xf32>
    %304 = tpu.concatenate %302, %303 in 2 : vector<4x8x8xf32>, vector<4x8x56xf32> -> vector<4x8x64xf32>
    %305 = vector.extract_strided_slice %279 {offsets = [0, 0], sizes = [1, 64], strides = [1, 1]} : vector<27x64xf32> to vector<1x64xf32>
    %306 = vector.shape_cast %305 : vector<1x64xf32> to vector<64xf32>
    %307 = vector.shape_cast %306 : vector<64xf32> to vector<1x1x64xf32>
    %308 = vector.broadcast %307 : vector<1x1x64xf32> to vector<4x8x64xf32>
    %309 = arith.mulf %304, %308 : vector<4x8x64xf32>
    %310 = arith.addf %295, %309 : vector<4x8x64xf32>
    %311 = vector.extract_strided_slice %279 {offsets = [1, 0], sizes = [1, 64], strides = [1, 1]} : vector<27x64xf32> to vector<1x64xf32>
    %312 = vector.shape_cast %311 : vector<1x64xf32> to vector<64xf32>
    %313 = vector.shape_cast %312 : vector<64xf32> to vector<1x1x64xf32>
    %314 = vector.broadcast %313 : vector<1x1x64xf32> to vector<4x8x64xf32>
    %315 = arith.mulf %301, %314 : vector<4x8x64xf32>
    %316 = arith.addf %310, %315 : vector<4x8x64xf32>
    %cst_73 = arith.constant 0.000000e+00 : f32
    %317 = vector.broadcast %cst_73 : f32 to vector<4x8x8xf32>
    %318 = vector.extract_strided_slice %301 {offsets = [0, 0, 8], sizes = [4, 8, 56], strides = [1, 1, 1]} : vector<4x8x64xf32> to vector<4x8x56xf32>
    %319 = tpu.concatenate %318, %317 in 2 : vector<4x8x56xf32>, vector<4x8x8xf32> -> vector<4x8x64xf32>
    %320 = vector.extract_strided_slice %279 {offsets = [2, 0], sizes = [1, 64], strides = [1, 1]} : vector<27x64xf32> to vector<1x64xf32>
    %321 = vector.shape_cast %320 : vector<1x64xf32> to vector<64xf32>
    %322 = vector.shape_cast %321 : vector<64xf32> to vector<1x1x64xf32>
    %323 = vector.broadcast %322 : vector<1x1x64xf32> to vector<4x8x64xf32>
    %324 = arith.mulf %319, %323 : vector<4x8x64xf32>
    %325 = arith.addf %316, %324 : vector<4x8x64xf32>
    %cst_74 = arith.constant 0.000000e+00 : f32
    %326 = vector.broadcast %cst_74 : f32 to vector<4x8x8xf32>
    %327 = vector.extract_strided_slice %298 {offsets = [0, 0, 0], sizes = [4, 8, 56], strides = [1, 1, 1]} : vector<4x8x64xf32> to vector<4x8x56xf32>
    %328 = tpu.concatenate %326, %327 in 2 : vector<4x8x8xf32>, vector<4x8x56xf32> -> vector<4x8x64xf32>
    %329 = vector.extract_strided_slice %279 {offsets = [3, 0], sizes = [1, 64], strides = [1, 1]} : vector<27x64xf32> to vector<1x64xf32>
    %330 = vector.shape_cast %329 : vector<1x64xf32> to vector<64xf32>
    %331 = vector.shape_cast %330 : vector<64xf32> to vector<1x1x64xf32>
    %332 = vector.broadcast %331 : vector<1x1x64xf32> to vector<4x8x64xf32>
    %333 = arith.mulf %328, %332 : vector<4x8x64xf32>
    %334 = arith.addf %325, %333 : vector<4x8x64xf32>
    %335 = vector.extract_strided_slice %279 {offsets = [4, 0], sizes = [1, 64], strides = [1, 1]} : vector<27x64xf32> to vector<1x64xf32>
    %336 = vector.shape_cast %335 : vector<1x64xf32> to vector<64xf32>
    %337 = vector.shape_cast %336 : vector<64xf32> to vector<1x1x64xf32>
    %338 = vector.broadcast %337 : vector<1x1x64xf32> to vector<4x8x64xf32>
    %339 = arith.mulf %298, %338 : vector<4x8x64xf32>
    %340 = arith.addf %334, %339 : vector<4x8x64xf32>
    %cst_75 = arith.constant 0.000000e+00 : f32
    %341 = vector.broadcast %cst_75 : f32 to vector<4x8x8xf32>
    %342 = vector.extract_strided_slice %298 {offsets = [0, 0, 8], sizes = [4, 8, 56], strides = [1, 1, 1]} : vector<4x8x64xf32> to vector<4x8x56xf32>
    %343 = tpu.concatenate %342, %341 in 2 : vector<4x8x56xf32>, vector<4x8x8xf32> -> vector<4x8x64xf32>
    %344 = vector.extract_strided_slice %279 {offsets = [5, 0], sizes = [1, 64], strides = [1, 1]} : vector<27x64xf32> to vector<1x64xf32>
    %345 = vector.shape_cast %344 : vector<1x64xf32> to vector<64xf32>
    %346 = vector.shape_cast %345 : vector<64xf32> to vector<1x1x64xf32>
    %347 = vector.broadcast %346 : vector<1x1x64xf32> to vector<4x8x64xf32>
    %348 = arith.mulf %343, %347 : vector<4x8x64xf32>
    %349 = arith.addf %340, %348 : vector<4x8x64xf32>
    %cst_76 = arith.constant 0.000000e+00 : f32
    %350 = vector.broadcast %cst_76 : f32 to vector<4x1x64xf32>
    %351 = vector.extract_strided_slice %298 {offsets = [0, 1, 0], sizes = [4, 7, 64], strides = [1, 1, 1]} : vector<4x8x64xf32> to vector<4x7x64xf32>
    %352 = tpu.concatenate %351, %350 in 1 : vector<4x7x64xf32>, vector<4x1x64xf32> -> vector<4x8x64xf32>
    %cst_77 = arith.constant 0.000000e+00 : f32
    %353 = vector.broadcast %cst_77 : f32 to vector<4x8x8xf32>
    %354 = vector.extract_strided_slice %352 {offsets = [0, 0, 0], sizes = [4, 8, 56], strides = [1, 1, 1]} : vector<4x8x64xf32> to vector<4x8x56xf32>
    %355 = tpu.concatenate %353, %354 in 2 : vector<4x8x8xf32>, vector<4x8x56xf32> -> vector<4x8x64xf32>
    %356 = vector.extract_strided_slice %279 {offsets = [6, 0], sizes = [1, 64], strides = [1, 1]} : vector<27x64xf32> to vector<1x64xf32>
    %357 = vector.shape_cast %356 : vector<1x64xf32> to vector<64xf32>
    %358 = vector.shape_cast %357 : vector<64xf32> to vector<1x1x64xf32>
    %359 = vector.broadcast %358 : vector<1x1x64xf32> to vector<4x8x64xf32>
    %360 = arith.mulf %355, %359 : vector<4x8x64xf32>
    %361 = arith.addf %349, %360 : vector<4x8x64xf32>
    %362 = vector.extract_strided_slice %279 {offsets = [7, 0], sizes = [1, 64], strides = [1, 1]} : vector<27x64xf32> to vector<1x64xf32>
    %363 = vector.shape_cast %362 : vector<1x64xf32> to vector<64xf32>
    %364 = vector.shape_cast %363 : vector<64xf32> to vector<1x1x64xf32>
    %365 = vector.broadcast %364 : vector<1x1x64xf32> to vector<4x8x64xf32>
    %366 = arith.mulf %352, %365 : vector<4x8x64xf32>
    %367 = arith.addf %361, %366 : vector<4x8x64xf32>
    %cst_78 = arith.constant 0.000000e+00 : f32
    %368 = vector.broadcast %cst_78 : f32 to vector<4x8x8xf32>
    %369 = vector.extract_strided_slice %352 {offsets = [0, 0, 8], sizes = [4, 8, 56], strides = [1, 1, 1]} : vector<4x8x64xf32> to vector<4x8x56xf32>
    %370 = tpu.concatenate %369, %368 in 2 : vector<4x8x56xf32>, vector<4x8x8xf32> -> vector<4x8x64xf32>
    %371 = vector.extract_strided_slice %279 {offsets = [8, 0], sizes = [1, 64], strides = [1, 1]} : vector<27x64xf32> to vector<1x64xf32>
    %372 = vector.shape_cast %371 : vector<1x64xf32> to vector<64xf32>
    %373 = vector.shape_cast %372 : vector<64xf32> to vector<1x1x64xf32>
    %374 = vector.broadcast %373 : vector<1x1x64xf32> to vector<4x8x64xf32>
    %375 = arith.mulf %370, %374 : vector<4x8x64xf32>
    %376 = arith.addf %367, %375 : vector<4x8x64xf32>
    %cst_79 = arith.constant 0.000000e+00 : f32
    %377 = vector.broadcast %cst_79 : f32 to vector<4x1x64xf32>
    %378 = vector.extract_strided_slice %292 {offsets = [0, 0, 0], sizes = [4, 7, 64], strides = [1, 1, 1]} : vector<4x8x64xf32> to vector<4x7x64xf32>
    %379 = tpu.concatenate %377, %378 in 1 : vector<4x1x64xf32>, vector<4x7x64xf32> -> vector<4x8x64xf32>
    %cst_80 = arith.constant 0.000000e+00 : f32
    %380 = vector.broadcast %cst_80 : f32 to vector<4x8x8xf32>
    %381 = vector.extract_strided_slice %379 {offsets = [0, 0, 0], sizes = [4, 8, 56], strides = [1, 1, 1]} : vector<4x8x64xf32> to vector<4x8x56xf32>
    %382 = tpu.concatenate %380, %381 in 2 : vector<4x8x8xf32>, vector<4x8x56xf32> -> vector<4x8x64xf32>
    %383 = vector.extract_strided_slice %279 {offsets = [9, 0], sizes = [1, 64], strides = [1, 1]} : vector<27x64xf32> to vector<1x64xf32>
    %384 = vector.shape_cast %383 : vector<1x64xf32> to vector<64xf32>
    %385 = vector.shape_cast %384 : vector<64xf32> to vector<1x1x64xf32>
    %386 = vector.broadcast %385 : vector<1x1x64xf32> to vector<4x8x64xf32>
    %387 = arith.mulf %382, %386 : vector<4x8x64xf32>
    %388 = arith.addf %376, %387 : vector<4x8x64xf32>
    %389 = vector.extract_strided_slice %279 {offsets = [10, 0], sizes = [1, 64], strides = [1, 1]} : vector<27x64xf32> to vector<1x64xf32>
    %390 = vector.shape_cast %389 : vector<1x64xf32> to vector<64xf32>
    %391 = vector.shape_cast %390 : vector<64xf32> to vector<1x1x64xf32>
    %392 = vector.broadcast %391 : vector<1x1x64xf32> to vector<4x8x64xf32>
    %393 = arith.mulf %379, %392 : vector<4x8x64xf32>
    %394 = arith.addf %388, %393 : vector<4x8x64xf32>
    %cst_81 = arith.constant 0.000000e+00 : f32
    %395 = vector.broadcast %cst_81 : f32 to vector<4x8x8xf32>
    %396 = vector.extract_strided_slice %379 {offsets = [0, 0, 8], sizes = [4, 8, 56], strides = [1, 1, 1]} : vector<4x8x64xf32> to vector<4x8x56xf32>
    %397 = tpu.concatenate %396, %395 in 2 : vector<4x8x56xf32>, vector<4x8x8xf32> -> vector<4x8x64xf32>
    %398 = vector.extract_strided_slice %279 {offsets = [11, 0], sizes = [1, 64], strides = [1, 1]} : vector<27x64xf32> to vector<1x64xf32>
    %399 = vector.shape_cast %398 : vector<1x64xf32> to vector<64xf32>
    %400 = vector.shape_cast %399 : vector<64xf32> to vector<1x1x64xf32>
    %401 = vector.broadcast %400 : vector<1x1x64xf32> to vector<4x8x64xf32>
    %402 = arith.mulf %397, %401 : vector<4x8x64xf32>
    %403 = arith.addf %394, %402 : vector<4x8x64xf32>
    %cst_82 = arith.constant 0.000000e+00 : f32
    %404 = vector.broadcast %cst_82 : f32 to vector<4x8x8xf32>
    %405 = vector.extract_strided_slice %292 {offsets = [0, 0, 0], sizes = [4, 8, 56], strides = [1, 1, 1]} : vector<4x8x64xf32> to vector<4x8x56xf32>
    %406 = tpu.concatenate %404, %405 in 2 : vector<4x8x8xf32>, vector<4x8x56xf32> -> vector<4x8x64xf32>
    %407 = vector.extract_strided_slice %279 {offsets = [12, 0], sizes = [1, 64], strides = [1, 1]} : vector<27x64xf32> to vector<1x64xf32>
    %408 = vector.shape_cast %407 : vector<1x64xf32> to vector<64xf32>
    %409 = vector.shape_cast %408 : vector<64xf32> to vector<1x1x64xf32>
    %410 = vector.broadcast %409 : vector<1x1x64xf32> to vector<4x8x64xf32>
    %411 = arith.mulf %406, %410 : vector<4x8x64xf32>
    %412 = arith.addf %403, %411 : vector<4x8x64xf32>
    %413 = vector.extract_strided_slice %279 {offsets = [13, 0], sizes = [1, 64], strides = [1, 1]} : vector<27x64xf32> to vector<1x64xf32>
    %414 = vector.shape_cast %413 : vector<1x64xf32> to vector<64xf32>
    %415 = vector.shape_cast %414 : vector<64xf32> to vector<1x1x64xf32>
    %416 = vector.broadcast %415 : vector<1x1x64xf32> to vector<4x8x64xf32>
    %417 = arith.mulf %292, %416 : vector<4x8x64xf32>
    %418 = arith.addf %412, %417 : vector<4x8x64xf32>
    %cst_83 = arith.constant 0.000000e+00 : f32
    %419 = vector.broadcast %cst_83 : f32 to vector<4x8x8xf32>
    %420 = vector.extract_strided_slice %292 {offsets = [0, 0, 8], sizes = [4, 8, 56], strides = [1, 1, 1]} : vector<4x8x64xf32> to vector<4x8x56xf32>
    %421 = tpu.concatenate %420, %419 in 2 : vector<4x8x56xf32>, vector<4x8x8xf32> -> vector<4x8x64xf32>
    %422 = vector.extract_strided_slice %279 {offsets = [14, 0], sizes = [1, 64], strides = [1, 1]} : vector<27x64xf32> to vector<1x64xf32>
    %423 = vector.shape_cast %422 : vector<1x64xf32> to vector<64xf32>
    %424 = vector.shape_cast %423 : vector<64xf32> to vector<1x1x64xf32>
    %425 = vector.broadcast %424 : vector<1x1x64xf32> to vector<4x8x64xf32>
    %426 = arith.mulf %421, %425 : vector<4x8x64xf32>
    %427 = arith.addf %418, %426 : vector<4x8x64xf32>
    %cst_84 = arith.constant 0.000000e+00 : f32
    %428 = vector.broadcast %cst_84 : f32 to vector<4x1x64xf32>
    %429 = vector.extract_strided_slice %292 {offsets = [0, 1, 0], sizes = [4, 7, 64], strides = [1, 1, 1]} : vector<4x8x64xf32> to vector<4x7x64xf32>
    %430 = tpu.concatenate %429, %428 in 1 : vector<4x7x64xf32>, vector<4x1x64xf32> -> vector<4x8x64xf32>
    %cst_85 = arith.constant 0.000000e+00 : f32
    %431 = vector.broadcast %cst_85 : f32 to vector<4x8x8xf32>
    %432 = vector.extract_strided_slice %430 {offsets = [0, 0, 0], sizes = [4, 8, 56], strides = [1, 1, 1]} : vector<4x8x64xf32> to vector<4x8x56xf32>
    %433 = tpu.concatenate %431, %432 in 2 : vector<4x8x8xf32>, vector<4x8x56xf32> -> vector<4x8x64xf32>
    %434 = vector.extract_strided_slice %279 {offsets = [15, 0], sizes = [1, 64], strides = [1, 1]} : vector<27x64xf32> to vector<1x64xf32>
    %435 = vector.shape_cast %434 : vector<1x64xf32> to vector<64xf32>
    %436 = vector.shape_cast %435 : vector<64xf32> to vector<1x1x64xf32>
    %437 = vector.broadcast %436 : vector<1x1x64xf32> to vector<4x8x64xf32>
    %438 = arith.mulf %433, %437 : vector<4x8x64xf32>
    %439 = arith.addf %427, %438 : vector<4x8x64xf32>
    %440 = vector.extract_strided_slice %279 {offsets = [16, 0], sizes = [1, 64], strides = [1, 1]} : vector<27x64xf32> to vector<1x64xf32>
    %441 = vector.shape_cast %440 : vector<1x64xf32> to vector<64xf32>
    %442 = vector.shape_cast %441 : vector<64xf32> to vector<1x1x64xf32>
    %443 = vector.broadcast %442 : vector<1x1x64xf32> to vector<4x8x64xf32>
    %444 = arith.mulf %430, %443 : vector<4x8x64xf32>
    %445 = arith.addf %439, %444 : vector<4x8x64xf32>
    %cst_86 = arith.constant 0.000000e+00 : f32
    %446 = vector.broadcast %cst_86 : f32 to vector<4x8x8xf32>
    %447 = vector.extract_strided_slice %430 {offsets = [0, 0, 8], sizes = [4, 8, 56], strides = [1, 1, 1]} : vector<4x8x64xf32> to vector<4x8x56xf32>
    %448 = tpu.concatenate %447, %446 in 2 : vector<4x8x56xf32>, vector<4x8x8xf32> -> vector<4x8x64xf32>
    %449 = vector.extract_strided_slice %279 {offsets = [17, 0], sizes = [1, 64], strides = [1, 1]} : vector<27x64xf32> to vector<1x64xf32>
    %450 = vector.shape_cast %449 : vector<1x64xf32> to vector<64xf32>
    %451 = vector.shape_cast %450 : vector<64xf32> to vector<1x1x64xf32>
    %452 = vector.broadcast %451 : vector<1x1x64xf32> to vector<4x8x64xf32>
    %453 = arith.mulf %448, %452 : vector<4x8x64xf32>
    %454 = arith.addf %445, %453 : vector<4x8x64xf32>
    %cst_87 = arith.constant 0.000000e+00 : f32
    %455 = vector.broadcast %cst_87 : f32 to vector<1x8x64xf32>
    %456 = vector.extract_strided_slice %292 {offsets = [1, 0, 0], sizes = [3, 8, 64], strides = [1, 1, 1]} : vector<4x8x64xf32> to vector<3x8x64xf32>
    %457 = tpu.concatenate %456, %455 in 0 : vector<3x8x64xf32>, vector<1x8x64xf32> -> vector<4x8x64xf32>
    %cst_88 = arith.constant 0.000000e+00 : f32
    %458 = vector.broadcast %cst_88 : f32 to vector<4x1x64xf32>
    %459 = vector.extract_strided_slice %457 {offsets = [0, 0, 0], sizes = [4, 7, 64], strides = [1, 1, 1]} : vector<4x8x64xf32> to vector<4x7x64xf32>
    %460 = tpu.concatenate %458, %459 in 1 : vector<4x1x64xf32>, vector<4x7x64xf32> -> vector<4x8x64xf32>
    %cst_89 = arith.constant 0.000000e+00 : f32
    %461 = vector.broadcast %cst_89 : f32 to vector<4x8x8xf32>
    %462 = vector.extract_strided_slice %460 {offsets = [0, 0, 0], sizes = [4, 8, 56], strides = [1, 1, 1]} : vector<4x8x64xf32> to vector<4x8x56xf32>
    %463 = tpu.concatenate %461, %462 in 2 : vector<4x8x8xf32>, vector<4x8x56xf32> -> vector<4x8x64xf32>
    %464 = vector.extract_strided_slice %279 {offsets = [18, 0], sizes = [1, 64], strides = [1, 1]} : vector<27x64xf32> to vector<1x64xf32>
    %465 = vector.shape_cast %464 : vector<1x64xf32> to vector<64xf32>
    %466 = vector.shape_cast %465 : vector<64xf32> to vector<1x1x64xf32>
    %467 = vector.broadcast %466 : vector<1x1x64xf32> to vector<4x8x64xf32>
    %468 = arith.mulf %463, %467 : vector<4x8x64xf32>
    %469 = arith.addf %454, %468 : vector<4x8x64xf32>
    %470 = vector.extract_strided_slice %279 {offsets = [19, 0], sizes = [1, 64], strides = [1, 1]} : vector<27x64xf32> to vector<1x64xf32>
    %471 = vector.shape_cast %470 : vector<1x64xf32> to vector<64xf32>
    %472 = vector.shape_cast %471 : vector<64xf32> to vector<1x1x64xf32>
    %473 = vector.broadcast %472 : vector<1x1x64xf32> to vector<4x8x64xf32>
    %474 = arith.mulf %460, %473 : vector<4x8x64xf32>
    %475 = arith.addf %469, %474 : vector<4x8x64xf32>
    %cst_90 = arith.constant 0.000000e+00 : f32
    %476 = vector.broadcast %cst_90 : f32 to vector<4x8x8xf32>
    %477 = vector.extract_strided_slice %460 {offsets = [0, 0, 8], sizes = [4, 8, 56], strides = [1, 1, 1]} : vector<4x8x64xf32> to vector<4x8x56xf32>
    %478 = tpu.concatenate %477, %476 in 2 : vector<4x8x56xf32>, vector<4x8x8xf32> -> vector<4x8x64xf32>
    %479 = vector.extract_strided_slice %279 {offsets = [20, 0], sizes = [1, 64], strides = [1, 1]} : vector<27x64xf32> to vector<1x64xf32>
    %480 = vector.shape_cast %479 : vector<1x64xf32> to vector<64xf32>
    %481 = vector.shape_cast %480 : vector<64xf32> to vector<1x1x64xf32>
    %482 = vector.broadcast %481 : vector<1x1x64xf32> to vector<4x8x64xf32>
    %483 = arith.mulf %478, %482 : vector<4x8x64xf32>
    %484 = arith.addf %475, %483 : vector<4x8x64xf32>
    %cst_91 = arith.constant 0.000000e+00 : f32
    %485 = vector.broadcast %cst_91 : f32 to vector<4x8x8xf32>
    %486 = vector.extract_strided_slice %457 {offsets = [0, 0, 0], sizes = [4, 8, 56], strides = [1, 1, 1]} : vector<4x8x64xf32> to vector<4x8x56xf32>
    %487 = tpu.concatenate %485, %486 in 2 : vector<4x8x8xf32>, vector<4x8x56xf32> -> vector<4x8x64xf32>
    %488 = vector.extract_strided_slice %279 {offsets = [21, 0], sizes = [1, 64], strides = [1, 1]} : vector<27x64xf32> to vector<1x64xf32>
    %489 = vector.shape_cast %488 : vector<1x64xf32> to vector<64xf32>
    %490 = vector.shape_cast %489 : vector<64xf32> to vector<1x1x64xf32>
    %491 = vector.broadcast %490 : vector<1x1x64xf32> to vector<4x8x64xf32>
    %492 = arith.mulf %487, %491 : vector<4x8x64xf32>
    %493 = arith.addf %484, %492 : vector<4x8x64xf32>
    %494 = vector.extract_strided_slice %279 {offsets = [22, 0], sizes = [1, 64], strides = [1, 1]} : vector<27x64xf32> to vector<1x64xf32>
    %495 = vector.shape_cast %494 : vector<1x64xf32> to vector<64xf32>
    %496 = vector.shape_cast %495 : vector<64xf32> to vector<1x1x64xf32>
    %497 = vector.broadcast %496 : vector<1x1x64xf32> to vector<4x8x64xf32>
    %498 = arith.mulf %457, %497 : vector<4x8x64xf32>
    %499 = arith.addf %493, %498 : vector<4x8x64xf32>
    %cst_92 = arith.constant 0.000000e+00 : f32
    %500 = vector.broadcast %cst_92 : f32 to vector<4x8x8xf32>
    %501 = vector.extract_strided_slice %457 {offsets = [0, 0, 8], sizes = [4, 8, 56], strides = [1, 1, 1]} : vector<4x8x64xf32> to vector<4x8x56xf32>
    %502 = tpu.concatenate %501, %500 in 2 : vector<4x8x56xf32>, vector<4x8x8xf32> -> vector<4x8x64xf32>
    %503 = vector.extract_strided_slice %279 {offsets = [23, 0], sizes = [1, 64], strides = [1, 1]} : vector<27x64xf32> to vector<1x64xf32>
    %504 = vector.shape_cast %503 : vector<1x64xf32> to vector<64xf32>
    %505 = vector.shape_cast %504 : vector<64xf32> to vector<1x1x64xf32>
    %506 = vector.broadcast %505 : vector<1x1x64xf32> to vector<4x8x64xf32>
    %507 = arith.mulf %502, %506 : vector<4x8x64xf32>
    %508 = arith.addf %499, %507 : vector<4x8x64xf32>
    %cst_93 = arith.constant 0.000000e+00 : f32
    %509 = vector.broadcast %cst_93 : f32 to vector<4x1x64xf32>
    %510 = vector.extract_strided_slice %457 {offsets = [0, 1, 0], sizes = [4, 7, 64], strides = [1, 1, 1]} : vector<4x8x64xf32> to vector<4x7x64xf32>
    %511 = tpu.concatenate %510, %509 in 1 : vector<4x7x64xf32>, vector<4x1x64xf32> -> vector<4x8x64xf32>
    %cst_94 = arith.constant 0.000000e+00 : f32
    %512 = vector.broadcast %cst_94 : f32 to vector<4x8x8xf32>
    %513 = vector.extract_strided_slice %511 {offsets = [0, 0, 0], sizes = [4, 8, 56], strides = [1, 1, 1]} : vector<4x8x64xf32> to vector<4x8x56xf32>
    %514 = tpu.concatenate %512, %513 in 2 : vector<4x8x8xf32>, vector<4x8x56xf32> -> vector<4x8x64xf32>
    %515 = vector.extract_strided_slice %279 {offsets = [24, 0], sizes = [1, 64], strides = [1, 1]} : vector<27x64xf32> to vector<1x64xf32>
    %516 = vector.shape_cast %515 : vector<1x64xf32> to vector<64xf32>
    %517 = vector.shape_cast %516 : vector<64xf32> to vector<1x1x64xf32>
    %518 = vector.broadcast %517 : vector<1x1x64xf32> to vector<4x8x64xf32>
    %519 = arith.mulf %514, %518 : vector<4x8x64xf32>
    %520 = arith.addf %508, %519 : vector<4x8x64xf32>
    %521 = vector.extract_strided_slice %279 {offsets = [25, 0], sizes = [1, 64], strides = [1, 1]} : vector<27x64xf32> to vector<1x64xf32>
    %522 = vector.shape_cast %521 : vector<1x64xf32> to vector<64xf32>
    %523 = vector.shape_cast %522 : vector<64xf32> to vector<1x1x64xf32>
    %524 = vector.broadcast %523 : vector<1x1x64xf32> to vector<4x8x64xf32>
    %525 = arith.mulf %511, %524 : vector<4x8x64xf32>
    %526 = arith.addf %520, %525 : vector<4x8x64xf32>
    %cst_95 = arith.constant 0.000000e+00 : f32
    %527 = vector.broadcast %cst_95 : f32 to vector<4x8x8xf32>
    %528 = vector.extract_strided_slice %511 {offsets = [0, 0, 8], sizes = [4, 8, 56], strides = [1, 1, 1]} : vector<4x8x64xf32> to vector<4x8x56xf32>
    %529 = tpu.concatenate %528, %527 in 2 : vector<4x8x56xf32>, vector<4x8x8xf32> -> vector<4x8x64xf32>
    %530 = vector.extract_strided_slice %279 {offsets = [26, 0], sizes = [1, 64], strides = [1, 1]} : vector<27x64xf32> to vector<1x64xf32>
    %531 = vector.shape_cast %530 : vector<1x64xf32> to vector<64xf32>
    %532 = vector.shape_cast %531 : vector<64xf32> to vector<1x1x64xf32>
    %533 = vector.broadcast %532 : vector<1x1x64xf32> to vector<4x8x64xf32>
    %534 = arith.mulf %529, %533 : vector<4x8x64xf32>
    %535 = arith.addf %526, %534 : vector<4x8x64xf32>
    %cst_96 = arith.constant 0.000000e+00 : f32
    %536 = vector.broadcast %cst_96 : f32 to vector<4x8x64xf32>
    %537 = arith.maximumf %535, %536 : vector<4x8x64xf32>
    %538 = vector.shape_cast %537 : vector<4x8x64xf32> to vector<32x64xf32>
    %cst_97 = arith.constant dense<0.000000e+00> : vector<32x32xf32>
    %539 = tpu.matmul %538, %283, %cst_97 {dimension_numbers = #tpu.dot_dimension_numbers<[1], [0], [0], [1], [0, 0, 1, 1], [], []>} : vector<32x64xf32>, vector<64x32xf32>, vector<32x32xf32> -> vector<32x32xf32>
    %540 = vector.broadcast %285 : vector<1x32xf32> to vector<32x32xf32>
    %541 = arith.addf %539, %540 : vector<32x32xf32>
    %542 = vector.shape_cast %541 : vector<32x32xf32> to vector<4x8x32xf32>
    %543 = arith.addf %273, %542 : vector<4x8x32xf32>
    %cst_98 = arith.constant 0.000000e+00 : f32
    %544 = vector.broadcast %cst_98 : f32 to vector<4x8x32xf32>
    %545 = arith.maximumf %543, %544 : vector<4x8x32xf32>
    %c0_99 = arith.constant 0 : index
    %c0_100 = arith.constant 0 : index
    %c0_101 = arith.constant 0 : index
    %c0_102 = arith.constant 0 : index
    %546 = vector.load %arg8[%c0_99, %c0_100, %c0_101, %c0_102] : memref<1x4x8x32xf32, #tpu.memory_space<vmem>>, vector<1x4x8x32xf32>
    %547 = vector.shape_cast %546 : vector<1x4x8x32xf32> to vector<4x8x32xf32>
    %548 = vector.shape_cast %545 : vector<4x8x32xf32> to vector<1x4x8x32xf32>
    tpu.vector_store %arg8[%c0_99, %c0_100, %c0_101, %c0_102], %548 {strides = array<i32>} : memref<1x4x8x32xf32, #tpu.memory_space<vmem>>, vector<1x4x8x32xf32>,
    return
  }
  func.func @transform_0(%arg0: i32) -> (i32, i32, i32, i32) {
    %c0_i32 = arith.constant 0 : i32
    %c0_i32_0 = arith.constant 0 : i32
    %c0_i32_1 = arith.constant 0 : i32
    %c0_i32_2 = arith.constant 0 : i32
    return %arg0, %c0_i32, %c0_i32_0, %c0_i32_1 : i32, i32, i32, i32
  }
  func.func @transform_1(%arg0: i32) -> (i32, i32, i32) {
    %c0_i32 = arith.constant 0 : i32
    %c0_i32_0 = arith.constant 0 : i32
    %c0_i32_1 = arith.constant 0 : i32
    %c0_i32_2 = arith.constant 0 : i32
    return %c0_i32, %c0_i32_0, %c0_i32_1 : i32, i32, i32
  }
  func.func @transform_2(%arg0: i32) -> (i32, i32, i32) {
    %c0_i32 = arith.constant 0 : i32
    %c0_i32_0 = arith.constant 0 : i32
    %c0_i32_1 = arith.constant 0 : i32
    %c0_i32_2 = arith.constant 0 : i32
    return %c0_i32, %c0_i32_0, %c0_i32_1 : i32, i32, i32
  }
  func.func @transform_3(%arg0: i32) -> (i32, i32, i32) {
    %c0_i32 = arith.constant 0 : i32
    %c0_i32_0 = arith.constant 0 : i32
    %c0_i32_1 = arith.constant 0 : i32
    %c0_i32_2 = arith.constant 0 : i32
    return %c0_i32, %c0_i32_0, %c0_i32_1 : i32, i32, i32
  }
  func.func @transform_4(%arg0: i32) -> (i32, i32, i32) {
    %c0_i32 = arith.constant 0 : i32
    %c0_i32_0 = arith.constant 0 : i32
    %c0_i32_1 = arith.constant 0 : i32
    %c0_i32_2 = arith.constant 0 : i32
    return %c0_i32, %c0_i32_0, %c0_i32_1 : i32, i32, i32
  }
  func.func @transform_5(%arg0: i32) -> (i32, i32, i32) {
    %c0_i32 = arith.constant 0 : i32
    %c0_i32_0 = arith.constant 0 : i32
    %c0_i32_1 = arith.constant 0 : i32
    %c0_i32_2 = arith.constant 0 : i32
    return %c0_i32, %c0_i32_0, %c0_i32_1 : i32, i32, i32
  }
  func.func @transform_6(%arg0: i32) -> (i32, i32, i32) {
    %c0_i32 = arith.constant 0 : i32
    %c0_i32_0 = arith.constant 0 : i32
    %c0_i32_1 = arith.constant 0 : i32
    %c0_i32_2 = arith.constant 0 : i32
    return %c0_i32, %c0_i32_0, %c0_i32_1 : i32, i32, i32
  }
  func.func @transform_7(%arg0: i32) -> (i32, i32, i32, i32) {
    %c0_i32 = arith.constant 0 : i32
    %c0_i32_0 = arith.constant 0 : i32
    %c0_i32_1 = arith.constant 0 : i32
    %c0_i32_2 = arith.constant 0 : i32
    return %arg0, %c0_i32, %c0_i32_0, %c0_i32_1 : i32, i32, i32, i32
  }
}

</mosaic_0001>

<llo_original>
// kernel: res_stage_pallas.1
$region0: #{res_stage_pallas.1}
  #allocation0 [shape = 'u32[]', space=smem, size = 0x4, offset = 0x4, fixed_abs, tag = 'smem constant byte address 0x4 - core index']
  #allocation1 [shape = 'u32[144,128]{1,0:T(1,128)}', space=vmem, size = 0x12000, scoped, tag = 'internal scratch']
  %s0 = inlined_call_operand.vmem [shape: f32[2,4,8,32], index: 0, kind: input, shape index: {}, may-alias: {0,7}]
  %s1 = inlined_call_operand.vmem [shape: f32[2,32,64], index: 1, kind: input, shape index: {}]
  %s2 = inlined_call_operand.vmem [shape: f32[2,1,64], index: 2, kind: input, shape index: {}]
  %s3 = inlined_call_operand.vmem [shape: f32[2,27,64], index: 3, kind: input, shape index: {}]
  %s4 = inlined_call_operand.vmem [shape: f32[2,1,64], index: 4, kind: input, shape index: {}]
  %s5 = inlined_call_operand.vmem [shape: f32[2,64,32], index: 5, kind: input, shape index: {}]
  %s6 = inlined_call_operand.vmem [shape: f32[2,1,32], index: 6, kind: input, shape index: {}]
  %s7 = inlined_call_operand.vmem [shape: f32[2,4,8,32], index: 7, kind: output, shape index: {}, may-alias: {0,7}]
  %s8 = sld [smem:[#allocation0]]
  $region61: #{res_stage_pallas.1} parent=0
    _
  %s10 = ssub.s32 1, %s8
  %s11 = scalar_select 0, %s10, %s8
  loop: start=0, step=1, limit=4
  $region2: #{res_stage_pallas.1} parent=0 // loop_pre_header
    _
  $region3: #{res_stage_pallas.1} parent=0 // loop_header
    %s13 = sphi 0, %s17
    %p14 = scmp.ge.s32.totalorder %s13, 4
    %s23 = sphi 0, %s25
    %s26 = sphi 0, %s23
    %s27 = sphi 0, %s26
    %s43 = sphi 0, %s27
    %s47 = sphi 0, %s47
    %s49 = sphi 0, %s47
    %s50 = sphi 0, %s49
    %s64 = sphi 0, %s50
    %s68 = sphi 0, %s68
    %s70 = sphi 0, %s68
    %s71 = sphi 0, %s70
    %s85 = sphi 0, %s71
    %s89 = sphi 0, %s89
    %s91 = sphi 0, %s89
    %s92 = sphi 0, %s91
    %s106 = sphi 0, %s92
    %s110 = sphi 0, %s110
    %s112 = sphi 0, %s110
    %s113 = sphi 0, %s112
    %s127 = sphi 0, %s113
    %s131 = sphi 0, %s131
    %s133 = sphi 0, %s131
    %s134 = sphi 0, %s133
    %s148 = sphi 0, %s134
    %s152 = sphi 0, %s152
    %s154 = sphi 0, %s152
    %s155 = sphi 0, %s154
    %s169 = sphi 0, %s155
    %s175 = sphi 0, %s177
    %s178 = sphi 0, %s175
    %s179 = sphi 0, %s178
    %s195 = sphi 0, %s179
  $region4: #{res_stage_pallas.1} parent=0 // loop_header_branch
    %16 = sbr.rel (%p14) target = $region8
  $region5: #{res_stage_pallas.1} parent=0 // loop_body
    %s18 = ssub.s32 %s13, 1
    %s19 = ssub.s32 %s13, 2
    %s20 = sadd.s32 %s13, 1
    %s21 = ssub.s32 %s13, %s20
    %p22 = scmp.eq.s32.totalorder %s21, 0
    %s24 = sadd.s32 %s23, 1
    %s25 = scalar_select %p22, %s23, %s24
    %p28 = pneg %p22
    %p29 = scmp.eq.s32.totalorder %s13, 1
    %p30 = por %p28, %p29
    %p31 = scmp.ne.s32.totalorder %s23, %s26
    %p32 = scmp.eq.s32.totalorder %s13, 0
    %p33 = por %p31, %p32
    %p34 = scmp.ne.s32.totalorder %s23, %s26
    %p35 = scmp.eq.s32.totalorder %s18, 1
    %p36 = por %p34, %p35
    %p37 = scmp.ne.s32.totalorder %s26, %s27
    %p38 = scmp.eq.s32.totalorder %s18, 0
    %p39 = por %p37, %p38
    %p40 = scmp.ne.s32.totalorder %s26, %s27
    %p41 = scmp.eq.s32.totalorder %s19, 1
    %p42 = por %p40, %p41
    %p44 = scmp.ne.s32.totalorder %s27, %s43
    %p45 = scmp.eq.s32.totalorder %s19, 0
    %p46 = por %p44, %p45
    %s48 = sadd.s32 %s47, 1
    %p51 = scmp.eq.s32.totalorder %s13, 1
    %p52 = scmp.ne.s32.totalorder %s47, %s49
    %p53 = scmp.eq.s32.totalorder %s13, 0
    %p54 = por %p52, %p53
    %p55 = scmp.ne.s32.totalorder %s47, %s49
    %p56 = scmp.eq.s32.totalorder %s18, 1
    %p57 = por %p55, %p56
    %p58 = scmp.ne.s32.totalorder %s49, %s50
    %p59 = scmp.eq.s32.totalorder %s18, 0
    %p60 = por %p58, %p59
    %p61 = scmp.ne.s32.totalorder %s49, %s50
    %p62 = scmp.eq.s32.totalorder %s19, 1
    %p63 = por %p61, %p62
    %p65 = scmp.ne.s32.totalorder %s50, %s64
    %p66 = scmp.eq.s32.totalorder %s19, 0
    %p67 = por %p65, %p66
    %s69 = sadd.s32 %s68, 1
    %p72 = scmp.eq.s32.totalorder %s13, 1
    %p73 = scmp.ne.s32.totalorder %s68, %s70
    %p74 = scmp.eq.s32.totalorder %s13, 0
    %p75 = por %p73, %p74
    %p76 = scmp.ne.s32.totalorder %s68, %s70
    %p77 = scmp.eq.s32.totalorder %s18, 1
    %p78 = por %p76, %p77
    %p79 = scmp.ne.s32.totalorder %s70, %s71
    %p80 = scmp.eq.s32.totalorder %s18, 0
    %p81 = por %p79, %p80
    %p82 = scmp.ne.s32.totalorder %s70, %s71
    %p83 = scmp.eq.s32.totalorder %s19, 1
    %p84 = por %p82, %p83
    %p86 = scmp.ne.s32.totalorder %s71, %s85
    %p87 = scmp.eq.s32.totalorder %s19, 0
    %p88 = por %p86, %p87
    %s90 = sadd.s32 %s89, 1
    %p93 = scmp.eq.s32.totalorder %s13, 1
    %p94 = scmp.ne.s32.totalorder %s89, %s91
    %p95 = scmp.eq.s32.totalorder %s13, 0
    %p96 = por %p94, %p95
    %p97 = scmp.ne.s32.totalorder %s89, %s91
    %p98 = scmp.eq.s32.totalorder %s18, 1
    %p99 = por %p97, %p98
    %p100 = scmp.ne.s32.totalorder %s91, %s92
    %p101 = scmp.eq.s32.totalorder %s18, 0
    %p102 = por %p100, %p101
    %p103 = scmp.ne.s32.totalorder %s91, %s92
    %p104 = scmp.eq.s32.totalorder %s19, 1
    %p105 = por %p103, %p104
    %p107 = scmp.ne.s32.totalorder %s92, %s106
    %p108 = scmp.eq.s32.totalorder %s19, 0
    %p109 = por %p107, %p108
    %s111 = sadd.s32 %s110, 1
    %p114 = scmp.eq.s32.totalorder %s13, 1
    %p115 = scmp.ne.s32.totalorder %s110, %s112
    %p116 = scmp.eq.s32.totalorder %s13, 0
    %p117 = por %p115, %p116
    %p118 = scmp.ne.s32.totalorder %s110, %s112
    %p119 = scmp.eq.s32.totalorder %s18, 1
    %p120 = por %p118, %p119
    %p121 = scmp.ne.s32.totalorder %s112, %s113
    %p122 = scmp.eq.s32.totalorder %s18, 0
    %p123 = por %p121, %p122
    %p124 = scmp.ne.s32.totalorder %s112, %s113
    %p125 = scmp.eq.s32.totalorder %s19, 1
    %p126 = por %p124, %p125
    %p128 = scmp.ne.s32.totalorder %s113, %s127
    %p129 = scmp.eq.s32.totalorder %s19, 0
    %p130 = por %p128, %p129
    %s132 = sadd.s32 %s131, 1
    %p135 = scmp.eq.s32.totalorder %s13, 1
    %p136 = scmp.ne.s32.totalorder %s131, %s133
    %p137 = scmp.eq.s32.totalorder %s13, 0
    %p138 = por %p136, %p137
    %p139 = scmp.ne.s32.totalorder %s131, %s133
    %p140 = scmp.eq.s32.totalorder %s18, 1
    %p141 = por %p139, %p140
    %p142 = scmp.ne.s32.totalorder %s133, %s134
    %p143 = scmp.eq.s32.totalorder %s18, 0
    %p144 = por %p142, %p143
    %p145 = scmp.ne.s32.totalorder %s133, %s134
    %p146 = scmp.eq.s32.totalorder %s19, 1
    %p147 = por %p145, %p146
    %p149 = scmp.ne.s32.totalorder %s134, %s148
    %p150 = scmp.eq.s32.totalorder %s19, 0
    %p151 = por %p149, %p150
    %s153 = sadd.s32 %s152, 1
    %p156 = scmp.eq.s32.totalorder %s13, 1
    %p157 = scmp.ne.s32.totalorder %s152, %s154
    %p158 = scmp.eq.s32.totalorder %s13, 0
    %p159 = por %p157, %p158
    %p160 = scmp.ne.s32.totalorder %s152, %s154
    %p161 = scmp.eq.s32.totalorder %s18, 1
    %p162 = por %p160, %p161
    %p163 = scmp.ne.s32.totalorder %s154, %s155
    %p164 = scmp.eq.s32.totalorder %s18, 0
    %p165 = por %p163, %p164
    %p166 = scmp.ne.s32.totalorder %s154, %s155
    %p167 = scmp.eq.s32.totalorder %s19, 1
    %p168 = por %p166, %p167
    %p170 = scmp.ne.s32.totalorder %s155, %s169
    %p171 = scmp.eq.s32.totalorder %s19, 0
    %p172 = por %p170, %p171
    %s173 = ssub.s32 %s13, %s20
    %p174 = scmp.eq.s32.totalorder %s173, 0
    %s176 = sadd.s32 %s175, 1
    %s177 = scalar_select %p174, %s175, %s176
    %p180 = pneg %p174
    %p181 = scmp.eq.s32.totalorder %s13, 1
    %p182 = por %p180, %p181
    %p183 = scmp.ne.s32.totalorder %s175, %s178
    %p184 = scmp.eq.s32.totalorder %s13, 0
    %p185 = por %p183, %p184
    %p186 = scmp.ne.s32.totalorder %s175, %s178
    %p187 = scmp.eq.s32.totalorder %s18, 1
    %p188 = por %p186, %p187
    %p189 = scmp.ne.s32.totalorder %s178, %s179
    %p190 = scmp.eq.s32.totalorder %s18, 0
    %p191 = por %p189, %p190
    %p192 = scmp.ne.s32.totalorder %s178, %s179
    %p193 = scmp.eq.s32.totalorder %s19, 1
    %p194 = por %p192, %p193
    %p196 = scmp.ne.s32.totalorder %s179, %s195
    %p197 = scmp.eq.s32.totalorder %s19, 0
    %p198 = por %p196, %p197
    %p199 = scmp.le.s32.totalorder 1, %s13
    %p200 = scmp.lt.s32.totalorder %s13, 3
    %p201 = pnand %p199, %p200
    %p202 = pneg %p201
    // Predicated region
    $region9: #{res_stage_pallas.1} parent=5 // pred_check
      _
    $region10: #{res_stage_pallas.1} parent=5 // pred_check_branch
      %204 = sbr.rel (%p201) target = $region12
    $region11: #{res_stage_pallas.1} parent=5 // pred_region
      %s205 = ssub.s32 %s13, 1
      // Predicated region
      $region13: #{res_stage_pallas.1} parent=11 // pred_check
        %p206 = pneg %p60
      $region14: #{res_stage_pallas.1} parent=11 // pred_check_branch
        %208 = sbr.rel (%p206) target = $region16
      $region15: #{res_stage_pallas.1} parent=11 // pred_region
        _
      $region16: #{res_stage_pallas.1} parent=11 // pred_fallthru
        _
      // Predicated region
      $region17: #{res_stage_pallas.1} parent=11 // pred_check
        %p209 = pneg %p81
      $region18: #{res_stage_pallas.1} parent=11 // pred_check_branch
        %211 = sbr.rel (%p209) target = $region20
      $region19: #{res_stage_pallas.1} parent=11 // pred_region
        _
      $region20: #{res_stage_pallas.1} parent=11 // pred_fallthru
        _
      // Predicated region
      $region21: #{res_stage_pallas.1} parent=11 // pred_check
        %p212 = pneg %p102
      $region22: #{res_stage_pallas.1} parent=11 // pred_check_branch
        %214 = sbr.rel (%p212) target = $region24
      $region23: #{res_stage_pallas.1} parent=11 // pred_region
        _
      $region24: #{res_stage_pallas.1} parent=11 // pred_fallthru
        _
      // Predicated region
      $region25: #{res_stage_pallas.1} parent=11 // pred_check
        %p215 = pneg %p123
      $region26: #{res_stage_pallas.1} parent=11 // pred_check_branch
        %217 = sbr.rel (%p215) target = $region28
      $region27: #{res_stage_pallas.1} parent=11 // pred_region
        _
      $region28: #{res_stage_pallas.1} parent=11 // pred_fallthru
        _
      // Predicated region
      $region29: #{res_stage_pallas.1} parent=11 // pred_check
        %p218 = pneg %p144
      $region30: #{res_stage_pallas.1} parent=11 // pred_check_branch
        %220 = sbr.rel (%p218) target = $region32
      $region31: #{res_stage_pallas.1} parent=11 // pred_region
        _
      $region32: #{res_stage_pallas.1} parent=11 // pred_fallthru
        _
      // Predicated region
      $region33: #{res_stage_pallas.1} parent=11 // pred_check
        %p221 = pneg %p165
      $region34: #{res_stage_pallas.1} parent=11 // pred_check_branch
        %223 = sbr.rel (%p221) target = $region36
      $region35: #{res_stage_pallas.1} parent=11 // pred_region
        _
      $region36: #{res_stage_pallas.1} parent=11 // pred_fallthru
        _
    $region12: #{res_stage_pallas.1} parent=5 // pred_fallthru
      _
    %p224 = scmp.lt.s32.totalorder %s13, 2
    // Predicated region
    $region37: #{res_stage_pallas.1} parent=5 // pred_check
      %p225 = pneg %p224
    $region38: #{res_stage_pallas.1} parent=5 // pred_check_branch
      %227 = sbr.rel (%p225) target = $region40
    $region39: #{res_stage_pallas.1} parent=5 // pred_region
      // Predicated region
      $region41: #{res_stage_pallas.1} parent=39 // pred_check
        %p228 = pneg %p33
      $region42: #{res_stage_pallas.1} parent=39 // pred_check_branch
        %230 = sbr.rel (%p228) target = $region44
      $region43: #{res_stage_pallas.1} parent=39 // pred_region
        %p231 = scmp.lt.s32.totalorder %s13, 1
        %s232 = scalar_select %p231, %s13, 1
        %s233 = smul.addr %s232, 4
        %s234 = smul.addr %s233, 8
        %s235 = scalar_lea.vmem %s0, %s234
      $region44: #{res_stage_pallas.1} parent=39 // pred_fallthru
        _
    $region40: #{res_stage_pallas.1} parent=5 // pred_fallthru
      _
    %p236 = scmp.le.s32.totalorder 1, %s13
    %p237 = scmp.lt.s32.totalorder %s13, 3
    %p238 = pnand %p236, %p237
    %p239 = pneg %p238
    // Predicated region
    $region45: #{res_stage_pallas.1} parent=5 // pred_check
      _
    $region46: #{res_stage_pallas.1} parent=5 // pred_check_branch
      %241 = sbr.rel (%p238) target = $region48
    $region47: #{res_stage_pallas.1} parent=5 // pred_region
      %s242 = ssub.s32 %s13, 1
      %p243 = scmp.lt.s32.totalorder %s18, 1
      %s244 = scalar_select %p243, %s18, 1
      %s245 = smul.addr %s244, 4
      %s246 = smul.addr %s245, 8
      %s247 = scalar_lea.vmem %s0, %s246
      %p248 = pneg %p39
      %p249 = pneg %p36
      %p250 = pneg %p60
      %p251 = pneg %p57
      %p252 = pneg %p81
      %p253 = pneg %p78
      %p254 = pneg %p102
      %p255 = pneg %p99
      %p256 = pneg %p123
      %p257 = pneg %p120
      %p258 = pneg %p144
      %p259 = pneg %p141
      %p260 = pneg %p165
      %p261 = pneg %p162
      %p262 = pneg %p191
      %p263 = pneg %p188
      %p264 = scmp.lt.s32.totalorder %s18, 1
      %s265 = scalar_select %p264, %s18, 1
      %s266 = smul.addr %s265, 4
      %s267 = smul.addr %s266, 8
      %s268 = scalar_lea.vmem %s7, %s267
      %p269 = scmp.lt.s32.totalorder %s18, 1
      %s270 = scalar_select %p269, %s18, 1
      %s271 = smul.addr %s270, 4
      %s272 = smul.addr %s271, 8
      %s273 = scalar_lea.vmem %s0, %s272
      %p274 = scmp.lt.s32.totalorder %s18, 1
      %s275 = scalar_select %p274, %s18, 1
      %s276 = smul.addr %s275, 4
      %s277 = smul.addr %s276, 8
      %s278 = scalar_lea.vmem %s7, %s277
      %v279 = vld [vmem:[%s273] sm:$0xff]
      %v280 = vld [vmem:[%s273 + $0x8] sm:$0xff]
      %v281 = vld [vmem:[%s273 + $0x10] sm:$0xff]
      %v282 = vld [vmem:[%s273 + $0x18] sm:$0xff]
      %v283 = vld [vmem:[%s1] sm:$0xff]
      %v284 = vld [vmem:[%s1 + $0x8] sm:$0xff]
      %v285 = vld [vmem:[%s1 + $0x10] sm:$0xff]
      %v286 = vld [vmem:[%s1 + $0x18] sm:$0xff]
      %v287 = vld [vmem:[%s2] sm:$0x1]
      %v288 = vld [vmem:[%s3] sm:$0xff]
      %v289 = vld [vmem:[%s3 + $0x8] sm:$0xff]
      %v290 = vld [vmem:[%s3 + $0x10] sm:$0xff]
      %v291 = vld [vmem:[%s3 + $0x18] sm:$0x7]
      %v292 = vld [vmem:[%s4] sm:$0x1]
      %v293 = vld [vmem:[%s5] sm:$0xff]
      %v294 = vld [vmem:[%s5 + $0x8] sm:$0xff]
      %v295 = vld [vmem:[%s5 + $0x10] sm:$0xff]
      %v296 = vld [vmem:[%s5 + $0x18] sm:$0xff]
      %v297 = vld [vmem:[%s5 + $0x20] sm:$0xff]
      %v298 = vld [vmem:[%s5 + $0x28] sm:$0xff]
      %v299 = vld [vmem:[%s5 + $0x30] sm:$0xff]
      %v300 = vld [vmem:[%s5 + $0x38] sm:$0xff]
      %v301 = vld [vmem:[%s6] sm:$0x1]
      %v303 = vlaneseq
      %v304 = vshrl.u32 %v303, 7
      %v305 = vsub.s32 0, %v304
      %v306 = vrot.slane %v287, %v305
      %vm308 = vcmask 261120
      %v310 = vsel %vm308, %v279, 0
      %v313 = vsel %vm308, %v280, 0
      %v316 = vsel %vm308, %v281, 0
      %v319 = vsel %vm308, %v282, 0
      %321 = vmatprep.subr.mxu0 0.0
      %322 = vmatpush1.msra.mxu0 0.0
      %323 = vmatprep.subr.mxu0 0.0
      %324 = vmatpush1.msra.mxu0 0.0
      %325 = vmatprep.subr.mxu0 0.0
      %326 = vmatpush1.msra.mxu0 0.0
      %327 = vmatprep.subr.mxu0 0.0
      %328 = vmatpush1.msra.mxu0 0.0
      %329 = vmatprep.subr.mxu0 0.0
      %330 = vmatpush1.msra.mxu0 0.0
      %331 = vmatprep.subr.mxu0 0.0
      %332 = vmatpush1.msra.mxu0 0.0
      %333 = vmatprep.subr.mxu0 0.0
      %334 = vmatpush1.msra.mxu0 0.0
      %335 = vmatprep.subr.mxu0 0.0
      %336 = vmatpush1.msra.mxu0 0.0
      %337 = vmatprep.subr.mxu0 0.0
      %338 = vmatpush1.msra.mxu0 0.0
      %339 = vmatprep.subr.mxu0 0.0
      %340 = vmatpush1.msra.mxu0 0.0
      %341 = vmatprep.subr.mxu0 0.0
      %342 = vmatpush1.msra.mxu0 0.0
      %343 = vmatprep.subr.mxu0 0.0
      %344 = vmatpush1.msra.mxu0 0.0
      %345 = vmatprep.subr.mxu0 0.0
      %346 = vmatpush1.msra.mxu0 %v286
      %347 = vmatprep.subr.mxu0 0.0
      %348 = vmatpush1.msra.mxu0 %v285
      %349 = vmatprep.subr.mxu0 0.0
      %350 = vmatpush1.msra.mxu0 %v284
      %351 = vmatprep.subr.mxu0 0.0
      %352 = vmatpush1.msra.mxu0 %v283
      %353 = vmatprep.subr.mxu0 0.0
      %354 = vmatpush2.msra.mxu0 0.0
      %355 = vmatprep.subr.mxu0 0.0
      %356 = vmatpush2.msra.mxu0 0.0
      %357 = vmatprep.subr.mxu0 0.0
      %358 = vmatpush2.msra.mxu0 0.0
      %359 = vmatprep.subr.mxu0 0.0
      %360 = vmatpush2.msra.mxu0 0.0
      %361 = vmatprep.subr.mxu0 0.0
      %362 = vmatpush2.msra.mxu0 0.0
      %363 = vmatprep.subr.mxu0 0.0
      %364 = vmatpush2.msra.mxu0 0.0
      %365 = vmatprep.subr.mxu0 0.0
      %366 = vmatpush2.msra.mxu0 0.0
      %367 = vmatprep.subr.mxu0 0.0
      %368 = vmatpush2.msra.mxu0 0.0
      %369 = vmatprep.subr.mxu0 0.0
      %370 = vmatpush2.msra.mxu0 0.0
      %371 = vmatprep.subr.mxu0 0.0
      %372 = vmatpush2.msra.mxu0 0.0
      %373 = vmatprep.subr.mxu0 0.0
      %374 = vmatpush2.msra.mxu0 0.0
      %375 = vmatprep.subr.mxu0 0.0
      %376 = vmatpush2.msra.mxu0 0.0
      %377 = vmatprep.subr.mxu0 0.0
      %378 = vmatpush2.msra.mxu0 0.0
      %379 = vmatprep.subr.mxu0 0.0
      %380 = vmatpush2.msra.mxu0 0.0
      %381 = vmatprep.subr.mxu0 0.0
      %382 = vmatpush2.msra.mxu0 0.0
      %383 = vmatprep.subr.mxu0 0.0
      %384 = vmatpush2.msra.mxu0 0.0
      %385 = vmatprep.mubr.f32.mxu0 0.0
      %386 = vmatmul.mubr.f32.gmra.mxu0 %v310
      %v387 = vpop.f32.mrf.mxu0
      %v388 = vadd.f32 %v306, %v387
      %v389 = vpop.f32.mrf.mxu0
      %390 = vmatprep.mubr.f32.mxu0 0.0
      %391 = vmatmul.mubr.f32.gmra.mxu0 %v313
      %v392 = vpop.f32.mrf.mxu0
      %v393 = vadd.f32 %v306, %v392
      %v394 = vpop.f32.mrf.mxu0
      %395 = vmatprep.mubr.f32.mxu0 0.0
      %396 = vmatmul.mubr.f32.gmra.mxu0 %v316
      %v397 = vpop.f32.mrf.mxu0
      %v398 = vadd.f32 %v306, %v397
      %v399 = vpop.f32.mrf.mxu0
      %400 = vmatprep.mubr.f32.mxu0 0.0
      %401 = vmatmul.mubr.f32.gmra.mxu0 %v319
      %v402 = vpop.f32.mrf.mxu0
      %v403 = vadd.f32 %v306, %v402
      %v404 = vpop.f32.mrf.mxu0
      %405 = vdwg.mxu0
      %v406 = vmax.f32 %v388, 0.0
      %v407 = vmax.f32 %v393, 0.0
      %v408 = vmax.f32 %v398, 0.0
      %v409 = vmax.f32 %v403, 0.0
      %v411 = vlaneseq
      %v412 = vshrl.u32 %v411, 7
      %v413 = vsub.s32 0, %v412
      %v414 = vrot.slane %v292, %v413
      %v420 = vrot.slane 0.0, 7
      %v421 = vrot.slane %v406, 7
      %v422 = vrot.slane %v407, 7
      %v423 = vrot.slane %v408, 7
      %vm428 = vcmask 1040384
      %v429 = vsel %vm428, 0.0, %v420
      %v430 = vsel %vm428, 0.0, %v421
      %v431 = vsel %vm428, 0.0, %v422
      %v432 = vsel %vm428, 0.0, %v423
      %437 = vrot.lane.b32.xlu0 %v429, 8
      %v438 = vpop.permute.xlu0 %437
      %439 = vrot.lane.b32.xlu0 %v430, 8
      %v440 = vpop.permute.xlu0 %439
      %441 = vrot.lane.b32.xlu0 %v431, 8
      %v442 = vpop.permute.xlu0 %441
      %443 = vrot.lane.b32.xlu0 %v432, 8
      %v444 = vpop.permute.xlu0 %443
      %vm449 = vcmask 64512
      %v450 = vsel %vm449, 0.0, %v438
      %v451 = vsel %vm449, 0.0, %v440
      %v452 = vsel %vm449, 0.0, %v442
      %v453 = vsel %vm449, 0.0, %v444
      %v454 = vlaneseq
      %v455 = vshrl.u32 %v454, 7
      %v456 = vsub.s32 0, %v455
      %v457 = vrot.slane %v288, %v456
      %v458 = vmul.f32 %v450, %v457
      %v459 = vmul.f32 %v451, %v457
      %v460 = vmul.f32 %v452, %v457
      %v461 = vmul.f32 %v453, %v457
      %v462 = vadd.f32 %v414, %v458
      %v463 = vadd.f32 %v414, %v459
      %v464 = vadd.f32 %v414, %v460
      %v465 = vadd.f32 %v414, %v461
      %v466 = vlaneseq
      %v467 = vshrl.u32 %v466, 7
      %v468 = vsub.s32 1, %v467
      %v469 = vrot.slane %v288, %v468
      %v470 = vmul.f32 %v429, %v469
      %v471 = vmul.f32 %v430, %v469
      %v472 = vmul.f32 %v431, %v469
      %v473 = vmul.f32 %v432, %v469
      %v474 = vadd.f32 %v462, %v470
      %v475 = vadd.f32 %v463, %v471
      %v476 = vadd.f32 %v464, %v472
      %v477 = vadd.f32 %v465, %v473
      %478 = vrot.lane.b32.xlu0 %v429, 120
      %v479 = vpop.permute.xlu0 %478
      %480 = vrot.lane.b32.xlu0 %v430, 120
      %v481 = vpop.permute.xlu0 %480
      %482 = vrot.lane.b32.xlu0 %v431, 120
      %v483 = vpop.permute.xlu0 %482
      %484 = vrot.lane.b32.xlu0 %v432, 120
      %v485 = vpop.permute.xlu0 %484
      %vm490 = vcmask 457728
      %v491 = vsel %vm490, %v479, 0.0
      %v492 = vsel %vm490, %v481, 0.0
      %v493 = vsel %vm490, %v483, 0.0
      %v494 = vsel %vm490, %v485, 0.0
      %v495 = vlaneseq
      %v496 = vshrl.u32 %v495, 7
      %v497 = vsub.s32 2, %v496
      %v498 = vrot.slane %v288, %v497
      %v499 = vmul.f32 %v491, %v498
      %v500 = vmul.f32 %v492, %v498
      %v501 = vmul.f32 %v493, %v498
      %v502 = vmul.f32 %v494, %v498
      %v503 = vadd.f32 %v474, %v499
      %v504 = vadd.f32 %v475, %v500
      %v505 = vadd.f32 %v476, %v501
      %v506 = vadd.f32 %v477, %v502
      %507 = vrot.lane.b32.xlu0 0.0, 8
      %v508 = vpop.permute.xlu0 %507
      %509 = vrot.lane.b32.xlu0 %v406, 8
      %v510 = vpop.permute.xlu0 %509
      %511 = vrot.lane.b32.xlu0 %v407, 8
      %v512 = vpop.permute.xlu0 %511
      %513 = vrot.lane.b32.xlu0 %v408, 8
      %v514 = vpop.permute.xlu0 %513
      %v519 = vsel %vm449, 0.0, %v508
      %v520 = vsel %vm449, 0.0, %v510
      %v521 = vsel %vm449, 0.0, %v512
      %v522 = vsel %vm449, 0.0, %v514
      %v523 = vlaneseq
      %v524 = vshrl.u32 %v523, 7
      %v525 = vsub.s32 3, %v524
      %v526 = vrot.slane %v288, %v525
      %v527 = vmul.f32 %v519, %v526
      %v528 = vmul.f32 %v520, %v526
      %v529 = vmul.f32 %v521, %v526
      %v530 = vmul.f32 %v522, %v526
      %v531 = vadd.f32 %v503, %v527
      %v532 = vadd.f32 %v504, %v528
      %v533 = vadd.f32 %v505, %v529
      %v534 = vadd.f32 %v506, %v530
      %v535 = vlaneseq
      %v536 = vshrl.u32 %v535, 7
      %v537 = vsub.s32 4, %v536
      %v538 = vrot.slane %v288, %v537
      %v539 = vmul.f32 %v538, 0.0
      %v540 = vmul.f32 %v406, %v538
      %v541 = vmul.f32 %v407, %v538
      %v542 = vmul.f32 %v408, %v538
      %v543 = vadd.f32 %v531, %v539
      %v544 = vadd.f32 %v532, %v540
      %v545 = vadd.f32 %v533, %v541
      %v546 = vadd.f32 %v534, %v542
      %547 = vrot.lane.b32.xlu0 0.0, 120
      %v548 = vpop.permute.xlu0 %547
      %549 = vrot.lane.b32.xlu0 %v406, 120
      %v550 = vpop.permute.xlu0 %549
      %551 = vrot.lane.b32.xlu0 %v407, 120
      %v552 = vpop.permute.xlu0 %551
      %553 = vrot.lane.b32.xlu0 %v408, 120
      %v554 = vpop.permute.xlu0 %553
      %v559 = vsel %vm490, %v548, 0.0
      %v560 = vsel %vm490, %v550, 0.0
      %v561 = vsel %vm490, %v552, 0.0
      %v562 = vsel %vm490, %v554, 0.0
      %v563 = vlaneseq
      %v564 = vshrl.u32 %v563, 7
      %v565 = vsub.s32 5, %v564
      %v566 = vrot.slane %v288, %v565
      %v567 = vmul.f32 %v559, %v566
      %v568 = vmul.f32 %v560, %v566
      %v569 = vmul.f32 %v561, %v566
      %v570 = vmul.f32 %v562, %v566
      %v571 = vadd.f32 %v543, %v567
      %v572 = vadd.f32 %v544, %v568
      %v573 = vadd.f32 %v545, %v569
      %v574 = vadd.f32 %v546, %v570
      %v575 = vrot.slane 0.0, 1
      %v576 = vrot.slane %v406, 1
      %v577 = vrot.slane %v407, 1
      %v578 = vrot.slane %v408, 1
      %vm583 = vcmask 1046528
      %v584 = vsel %vm583, %v575, 0.0
      %v585 = vsel %vm583, %v576, 0.0
      %v586 = vsel %vm583, %v577, 0.0
      %v587 = vsel %vm583, %v578, 0.0
      %592 = vrot.lane.b32.xlu0 %v584, 8
      %v593 = vpop.permute.xlu0 %592
      %594 = vrot.lane.b32.xlu0 %v585, 8
      %v595 = vpop.permute.xlu0 %594
      %596 = vrot.lane.b32.xlu0 %v586, 8
      %v597 = vpop.permute.xlu0 %596
      %598 = vrot.lane.b32.xlu0 %v587, 8
      %v599 = vpop.permute.xlu0 %598
      %v604 = vsel %vm449, 0.0, %v593
      %v605 = vsel %vm449, 0.0, %v595
      %v606 = vsel %vm449, 0.0, %v597
      %v607 = vsel %vm449, 0.0, %v599
      %v608 = vlaneseq
      %v609 = vshrl.u32 %v608, 7
      %v610 = vsub.s32 6, %v609
      %v611 = vrot.slane %v288, %v610
      %v612 = vmul.f32 %v604, %v611
      %v613 = vmul.f32 %v605, %v611
      %v614 = vmul.f32 %v606, %v611
      %v615 = vmul.f32 %v607, %v611
      %v616 = vadd.f32 %v571, %v612
      %v617 = vadd.f32 %v572, %v613
      %v618 = vadd.f32 %v573, %v614
      %v619 = vadd.f32 %v574, %v615
      %v620 = vlaneseq
      %v621 = vshrl.u32 %v620, 7
      %v622 = vsub.s32 7, %v621
      %v623 = vrot.slane %v288, %v622
      %v624 = vmul.f32 %v584, %v623
      %v625 = vmul.f32 %v585, %v623
      %v626 = vmul.f32 %v586, %v623
      %v627 = vmul.f32 %v587, %v623
      %v628 = vadd.f32 %v616, %v624
      %v629 = vadd.f32 %v617, %v625
      %v630 = vadd.f32 %v618, %v626
      %v631 = vadd.f32 %v619, %v627
      %632 = vrot.lane.b32.xlu0 %v584, 120
      %v633 = vpop.permute.xlu0 %632
      %634 = vrot.lane.b32.xlu0 %v585, 120
      %v635 = vpop.permute.xlu0 %634
      %636 = vrot.lane.b32.xlu0 %v586, 120
      %v637 = vpop.permute.xlu0 %636
      %638 = vrot.lane.b32.xlu0 %v587, 120
      %v639 = vpop.permute.xlu0 %638
      %v644 = vsel %vm490, %v633, 0.0
      %v645 = vsel %vm490, %v635, 0.0
      %v646 = vsel %vm490, %v637, 0.0
      %v647 = vsel %vm490, %v639, 0.0
      %v648 = vlaneseq
      %v649 = vshrl.u32 %v648, 7
      %v650 = vsub.s32 0, %v649
      %v651 = vrot.slane %v289, %v650
      %v652 = vmul.f32 %v644, %v651
      %v653 = vmul.f32 %v645, %v651
      %v654 = vmul.f32 %v646, %v651
      %v655 = vmul.f32 %v647, %v651
      %v656 = vadd.f32 %v628, %v652
      %v657 = vadd.f32 %v629, %v653
      %v658 = vadd.f32 %v630, %v654
      %v659 = vadd.f32 %v631, %v655
      %v661 = vrot.slane %v409, 7
      %v663 = vsel %vm428, 0.0, %v661
      %665 = vrot.lane.b32.xlu0 %v663, 8
      %v666 = vpop.permute.xlu0 %665
      %v668 = vsel %vm449, 0.0, %v666
      %v669 = vlaneseq
      %v670 = vshrl.u32 %v669, 7
      %v671 = vsub.s32 1, %v670
      %v672 = vrot.slane %v289, %v671
      %v673 = vmul.f32 %v451, %v672
      %v674 = vmul.f32 %v452, %v672
      %v675 = vmul.f32 %v453, %v672
      %v676 = vmul.f32 %v668, %v672
      %v677 = vadd.f32 %v656, %v673
      %v678 = vadd.f32 %v657, %v674
      %v679 = vadd.f32 %v658, %v675
      %v680 = vadd.f32 %v659, %v676
      %v681 = vlaneseq
      %v682 = vshrl.u32 %v681, 7
      %v683 = vsub.s32 2, %v682
      %v684 = vrot.slane %v289, %v683
      %v685 = vmul.f32 %v430, %v684
      %v686 = vmul.f32 %v431, %v684
      %v687 = vmul.f32 %v432, %v684
      %v688 = vmul.f32 %v663, %v684
      %v689 = vadd.f32 %v677, %v685
      %v690 = vadd.f32 %v678, %v686
      %v691 = vadd.f32 %v679, %v687
      %v692 = vadd.f32 %v680, %v688
      %693 = vrot.lane.b32.xlu0 %v663, 120
      %v694 = vpop.permute.xlu0 %693
      %v696 = vsel %vm490, %v694, 0.0
      %v697 = vlaneseq
      %v698 = vshrl.u32 %v697, 7
      %v699 = vsub.s32 3, %v698
      %v700 = vrot.slane %v289, %v699
      %v701 = vmul.f32 %v492, %v700
      %v702 = vmul.f32 %v493, %v700
      %v703 = vmul.f32 %v494, %v700
      %v704 = vmul.f32 %v696, %v700
      %v705 = vadd.f32 %v689, %v701
      %v706 = vadd.f32 %v690, %v702
      %v707 = vadd.f32 %v691, %v703
      %v708 = vadd.f32 %v692, %v704
      %709 = vrot.lane.b32.xlu0 %v409, 8
      %v710 = vpop.permute.xlu0 %709
      %v712 = vsel %vm449, 0.0, %v710
      %v713 = vlaneseq
      %v714 = vshrl.u32 %v713, 7
      %v715 = vsub.s32 4, %v714
      %v716 = vrot.slane %v289, %v715
      %v717 = vmul.f32 %v520, %v716
      %v718 = vmul.f32 %v521, %v716
      %v719 = vmul.f32 %v522, %v716
      %v720 = vmul.f32 %v712, %v716
      %v721 = vadd.f32 %v705, %v717
      %v722 = vadd.f32 %v706, %v718
      %v723 = vadd.f32 %v707, %v719
      %v724 = vadd.f32 %v708, %v720
      %v725 = vlaneseq
      %v726 = vshrl.u32 %v725, 7
      %v727 = vsub.s32 5, %v726
      %v728 = vrot.slane %v289, %v727
      %v729 = vmul.f32 %v406, %v728
      %v730 = vmul.f32 %v407, %v728
      %v731 = vmul.f32 %v408, %v728
      %v732 = vmul.f32 %v409, %v728
      %v733 = vadd.f32 %v721, %v729
      %v734 = vadd.f32 %v722, %v730
      %v735 = vadd.f32 %v723, %v731
      %v736 = vadd.f32 %v724, %v732
      %737 = vrot.lane.b32.xlu0 %v409, 120
      %v738 = vpop.permute.xlu0 %737
      %v740 = vsel %vm490, %v738, 0.0
      %v741 = vlaneseq
      %v742 = vshrl.u32 %v741, 7
      %v743 = vsub.s32 6, %v742
      %v744 = vrot.slane %v289, %v743
      %v745 = vmul.f32 %v560, %v744
      %v746 = vmul.f32 %v561, %v744
      %v747 = vmul.f32 %v562, %v744
      %v748 = vmul.f32 %v740, %v744
      %v749 = vadd.f32 %v733, %v745
      %v750 = vadd.f32 %v734, %v746
      %v751 = vadd.f32 %v735, %v747
      %v752 = vadd.f32 %v736, %v748
      %v753 = vrot.slane %v409, 1
      %v755 = vsel %vm583, %v753, 0.0
      %757 = vrot.lane.b32.xlu0 %v755, 8
      %v758 = vpop.permute.xlu0 %757
      %v760 = vsel %vm449, 0.0, %v758
      %v761 = vlaneseq
      %v762 = vshrl.u32 %v761, 7
      %v763 = vsub.s32 7, %v762
      %v764 = vrot.slane %v289, %v763
      %v765 = vmul.f32 %v605, %v764
      %v766 = vmul.f32 %v606, %v764
      %v767 = vmul.f32 %v607, %v764
      %v768 = vmul.f32 %v760, %v764
      %v769 = vadd.f32 %v749, %v765
      %v770 = vadd.f32 %v750, %v766
      %v771 = vadd.f32 %v751, %v767
      %v772 = vadd.f32 %v752, %v768
      %v773 = vlaneseq
      %v774 = vshrl.u32 %v773, 7
      %v775 = vsub.s32 0, %v774
      %v776 = vrot.slane %v290, %v775
      %v777 = vmul.f32 %v585, %v776
      %v778 = vmul.f32 %v586, %v776
      %v779 = vmul.f32 %v587, %v776
      %v780 = vmul.f32 %v755, %v776
      %v781 = vadd.f32 %v769, %v777
      %v782 = vadd.f32 %v770, %v778
      %v783 = vadd.f32 %v771, %v779
      %v784 = vadd.f32 %v772, %v780
      %785 = vrot.lane.b32.xlu0 %v755, 120
      %v786 = vpop.permute.xlu0 %785
      %v788 = vsel %vm490, %v786, 0.0
      %v789 = vlaneseq
      %v790 = vshrl.u32 %v789, 7
      %v791 = vsub.s32 1, %v790
      %v792 = vrot.slane %v290, %v791
      %v793 = vmul.f32 %v645, %v792
      %v794 = vmul.f32 %v646, %v792
      %v795 = vmul.f32 %v647, %v792
      %v796 = vmul.f32 %v788, %v792
      %v797 = vadd.f32 %v781, %v793
      %v798 = vadd.f32 %v782, %v794
      %v799 = vadd.f32 %v783, %v795
      %v800 = vadd.f32 %v784, %v796
      %v801 = vlaneseq
      %v802 = vshrl.u32 %v801, 7
      %v803 = vsub.s32 2, %v802
      %v804 = vrot.slane %v290, %v803
      %v805 = vmul.f32 %v452, %v804
      %v806 = vmul.f32 %v453, %v804
      %v807 = vmul.f32 %v668, %v804
      %v808 = vmul.f32 %v450, %v804
      %v809 = vadd.f32 %v797, %v805
      %v810 = vadd.f32 %v798, %v806
      %v811 = vadd.f32 %v799, %v807
      %v812 = vadd.f32 %v800, %v808
      %v813 = vlaneseq
      %v814 = vshrl.u32 %v813, 7
      %v815 = vsub.s32 3, %v814
      %v816 = vrot.slane %v290, %v815
      %v817 = vmul.f32 %v431, %v816
      %v818 = vmul.f32 %v432, %v816
      %v819 = vmul.f32 %v663, %v816
      %v820 = vmul.f32 %v429, %v816
      %v821 = vadd.f32 %v809, %v817
      %v822 = vadd.f32 %v810, %v818
      %v823 = vadd.f32 %v811, %v819
      %v824 = vadd.f32 %v812, %v820
      %v825 = vlaneseq
      %v826 = vshrl.u32 %v825, 7
      %v827 = vsub.s32 4, %v826
      %v828 = vrot.slane %v290, %v827
      %v829 = vmul.f32 %v493, %v828
      %v830 = vmul.f32 %v494, %v828
      %v831 = vmul.f32 %v696, %v828
      %v832 = vmul.f32 %v491, %v828
      %v833 = vadd.f32 %v821, %v829
      %v834 = vadd.f32 %v822, %v830
      %v835 = vadd.f32 %v823, %v831
      %v836 = vadd.f32 %v824, %v832
      %v837 = vlaneseq
      %v838 = vshrl.u32 %v837, 7
      %v839 = vsub.s32 5, %v838
      %v840 = vrot.slane %v290, %v839
      %v841 = vmul.f32 %v521, %v840
      %v842 = vmul.f32 %v522, %v840
      %v843 = vmul.f32 %v712, %v840
      %v844 = vmul.f32 %v519, %v840
      %v845 = vadd.f32 %v833, %v841
      %v846 = vadd.f32 %v834, %v842
      %v847 = vadd.f32 %v835, %v843
      %v848 = vadd.f32 %v836, %v844
      %v849 = vlaneseq
      %v850 = vshrl.u32 %v849, 7
      %v851 = vsub.s32 6, %v850
      %v852 = vrot.slane %v290, %v851
      %v853 = vmul.f32 %v407, %v852
      %v854 = vmul.f32 %v408, %v852
      %v855 = vmul.f32 %v409, %v852
      %v856 = vmul.f32 %v852, 0.0
      %v857 = vadd.f32 %v845, %v853
      %v858 = vadd.f32 %v846, %v854
      %v859 = vadd.f32 %v847, %v855
      %v860 = vadd.f32 %v848, %v856
      %v861 = vlaneseq
      %v862 = vshrl.u32 %v861, 7
      %v863 = vsub.s32 7, %v862
      %v864 = vrot.slane %v290, %v863
      %v865 = vmul.f32 %v561, %v864
      %v866 = vmul.f32 %v562, %v864
      %v867 = vmul.f32 %v740, %v864
      %v868 = vmul.f32 %v559, %v864
      %v869 = vadd.f32 %v857, %v865
      %v870 = vadd.f32 %v858, %v866
      %v871 = vadd.f32 %v859, %v867
      %v872 = vadd.f32 %v860, %v868
      %v873 = vlaneseq
      %v874 = vshrl.u32 %v873, 7
      %v875 = vsub.s32 0, %v874
      %v876 = vrot.slane %v291, %v875
      %v877 = vmul.f32 %v606, %v876
      %v878 = vmul.f32 %v607, %v876
      %v879 = vmul.f32 %v760, %v876
      %v880 = vmul.f32 %v604, %v876
      %v881 = vadd.f32 %v869, %v877
      %v882 = vadd.f32 %v870, %v878
      %v883 = vadd.f32 %v871, %v879
      %v884 = vadd.f32 %v872, %v880
      %v885 = vlaneseq
      %v886 = vshrl.u32 %v885, 7
      %v887 = vsub.s32 1, %v886
      %v888 = vrot.slane %v291, %v887
      %v889 = vmul.f32 %v586, %v888
      %v890 = vmul.f32 %v587, %v888
      %v891 = vmul.f32 %v755, %v888
      %v892 = vmul.f32 %v584, %v888
      %v893 = vadd.f32 %v881, %v889
      %v894 = vadd.f32 %v882, %v890
      %v895 = vadd.f32 %v883, %v891
      %v896 = vadd.f32 %v884, %v892
      %v897 = vlaneseq
      %v898 = vshrl.u32 %v897, 7
      %v899 = vsub.s32 2, %v898
      %v900 = vrot.slane %v291, %v899
      %v901 = vmul.f32 %v646, %v900
      %v902 = vmul.f32 %v647, %v900
      %v903 = vmul.f32 %v788, %v900
      %v904 = vmul.f32 %v644, %v900
      %v905 = vadd.f32 %v893, %v901
      %v906 = vadd.f32 %v894, %v902
      %v907 = vadd.f32 %v895, %v903
      %v908 = vadd.f32 %v896, %v904
      %v909 = vmax.f32 %v905, 0.0
      %v910 = vmax.f32 %v906, 0.0
      %v911 = vmax.f32 %v907, 0.0
      %v912 = vmax.f32 %v908, 0.0
      %v914 = vlaneseq
      %v915 = vshrl.u32 %v914, 7
      %v916 = vsub.s32 0, %v915
      %v917 = vrot.slane %v301, %v916
      %vm919 = vcmask 523264
      %v921 = vsel %vm919, %v909, 0
      %v924 = vsel %vm919, %v910, 0
      %v927 = vsel %vm919, %v911, 0
      %v930 = vsel %vm919, %v912, 0
      %932 = vmatprep.subr.mxu0 0.0
      %933 = vmatpush1.msra.mxu0 0.0
      %934 = vmatprep.subr.mxu0 0.0
      %935 = vmatpush1.msra.mxu0 0.0
      %936 = vmatprep.subr.mxu0 0.0
      %937 = vmatpush1.msra.mxu0 0.0
      %938 = vmatprep.subr.mxu0 0.0
      %939 = vmatpush1.msra.mxu0 0.0
      %940 = vmatprep.subr.mxu0 0.0
      %941 = vmatpush1.msra.mxu0 0.0
      %942 = vmatprep.subr.mxu0 0.0
      %943 = vmatpush1.msra.mxu0 0.0
      %944 = vmatprep.subr.mxu0 0.0
      %945 = vmatpush1.msra.mxu0 0.0
      %946 = vmatprep.subr.mxu0 0.0
      %947 = vmatpush1.msra.mxu0 0.0
      %948 = vmatprep.subr.mxu0 0.0
      %949 = vmatpush1.msra.mxu0 %v300
      %950 = vmatprep.subr.mxu0 0.0
      %951 = vmatpush1.msra.mxu0 %v299
      %952 = vmatprep.subr.mxu0 0.0
      %953 = vmatpush1.msra.mxu0 %v298
      %954 = vmatprep.subr.mxu0 0.0
      %955 = vmatpush1.msra.mxu0 %v297
      %956 = vmatprep.subr.mxu0 0.0
      %957 = vmatpush1.msra.mxu0 %v296
      %958 = vmatprep.subr.mxu0 0.0
      %959 = vmatpush1.msra.mxu0 %v295
      %960 = vmatprep.subr.mxu0 0.0
      %961 = vmatpush1.msra.mxu0 %v294
      %962 = vmatprep.subr.mxu0 0.0
      %963 = vmatpush1.msra.mxu0 %v293
      %964 = vmatprep.subr.mxu0 0.0
      %965 = vmatpush2.msra.mxu0 0.0
      %966 = vmatprep.subr.mxu0 0.0
      %967 = vmatpush2.msra.mxu0 0.0
      %968 = vmatprep.subr.mxu0 0.0
      %969 = vmatpush2.msra.mxu0 0.0
      %970 = vmatprep.subr.mxu0 0.0
      %971 = vmatpush2.msra.mxu0 0.0
      %972 = vmatprep.subr.mxu0 0.0
      %973 = vmatpush2.msra.mxu0 0.0
      %974 = vmatprep.subr.mxu0 0.0
      %975 = vmatpush2.msra.mxu0 0.0
      %976 = vmatprep.subr.mxu0 0.0
      %977 = vmatpush2.msra.mxu0 0.0
      %978 = vmatprep.subr.mxu0 0.0
      %979 = vmatpush2.msra.mxu0 0.0
      %980 = vmatprep.subr.mxu0 0.0
      %981 = vmatpush2.msra.mxu0 0.0
      %982 = vmatprep.subr.mxu0 0.0
      %983 = vmatpush2.msra.mxu0 0.0
      %984 = vmatprep.subr.mxu0 0.0
      %985 = vmatpush2.msra.mxu0 0.0
      %986 = vmatprep.subr.mxu0 0.0
      %987 = vmatpush2.msra.mxu0 0.0
      %988 = vmatprep.subr.mxu0 0.0
      %989 = vmatpush2.msra.mxu0 0.0
      %990 = vmatprep.subr.mxu0 0.0
      %991 = vmatpush2.msra.mxu0 0.0
      %992 = vmatprep.subr.mxu0 0.0
      %993 = vmatpush2.msra.mxu0 0.0
      %994 = vmatprep.subr.mxu0 0.0
      %995 = vmatpush2.msra.mxu0 0.0
      %996 = vmatprep.mubr.f32.mxu0 0.0
      %997 = vmatmul.mubr.f32.gmra.mxu0 %v921
      %v998 = vpop.f32.mrf.mxu0
      %v999 = vadd.f32 %v917, %v998
      %v1000 = vpop.f32.mrf.mxu0
      %1001 = vmatprep.mubr.f32.mxu0 0.0
      %1002 = vmatmul.mubr.f32.gmra.mxu0 %v924
      %v1003 = vpop.f32.mrf.mxu0
      %v1004 = vadd.f32 %v917, %v1003
      %v1005 = vpop.f32.mrf.mxu0
      %1006 = vmatprep.mubr.f32.mxu0 0.0
      %1007 = vmatmul.mubr.f32.gmra.mxu0 %v927
      %v1008 = vpop.f32.mrf.mxu0
      %v1009 = vadd.f32 %v917, %v1008
      %v1010 = vpop.f32.mrf.mxu0
      %1011 = vmatprep.mubr.f32.mxu0 0.0
      %1012 = vmatmul.mubr.f32.gmra.mxu0 %v930
      %v1013 = vpop.f32.mrf.mxu0
      %v1014 = vadd.f32 %v917, %v1013
      %v1015 = vpop.f32.mrf.mxu0
      %1016 = vdwg.mxu0
      %v1017 = vadd.f32 %v279, %v999
      %v1018 = vadd.f32 %v280, %v1004
      %v1019 = vadd.f32 %v281, %v1009
      %v1020 = vadd.f32 %v282, %v1014
      %v1021 = vmax.f32 %v1017, 0.0
      %v1022 = vmax.f32 %v1018, 0.0
      %v1023 = vmax.f32 %v1019, 0.0
      %v1024 = vmax.f32 %v1020, 0.0
      %s1025 = scalar_lea.vmem %s1, 32
      %v1026 = vld [vmem:[%s1025] sm:$0xff]
      %v1027 = vld [vmem:[%s1025 + $0x8] sm:$0xff]
      %v1028 = vld [vmem:[%s1025 + $0x10] sm:$0xff]
      %v1029 = vld [vmem:[%s1025 + $0x18] sm:$0xff]
      %s1030 = scalar_lea.vmem %s2, 1
      %v1031 = vld [vmem:[%s1030] sm:$0x1]
      %s1032 = scalar_lea.vmem %s3, 32
      %v1033 = vld [vmem:[%s1032] sm:$0xff]
      %v1034 = vld [vmem:[%s1032 + $0x8] sm:$0xff]
      %v1035 = vld [vmem:[%s1032 + $0x10] sm:$0xff]
      %v1036 = vld [vmem:[%s1032 + $0x18] sm:$0x7]
      %s1037 = scalar_lea.vmem %s4, 1
      %v1038 = vld [vmem:[%s1037] sm:$0x1]
      %s1039 = scalar_lea.vmem %s5, 64
      %v1040 = vld [vmem:[%s1039] sm:$0xff]
      %v1041 = vld [vmem:[%s1039 + $0x8] sm:$0xff]
      %v1042 = vld [vmem:[%s1039 + $0x10] sm:$0xff]
      %v1043 = vld [vmem:[%s1039 + $0x18] sm:$0xff]
      %v1044 = vld [vmem:[%s1039 + $0x20] sm:$0xff]
      %v1045 = vld [vmem:[%s1039 + $0x28] sm:$0xff]
      %v1046 = vld [vmem:[%s1039 + $0x30] sm:$0xff]
      %v1047 = vld [vmem:[%s1039 + $0x38] sm:$0xff]
      %s1048 = scalar_lea.vmem %s6, 1
      %v1049 = vld [vmem:[%s1048] sm:$0x1]
      %v1051 = vlaneseq
      %v1052 = vshrl.u32 %v1051, 7
      %v1053 = vsub.s32 0, %v1052
      %v1054 = vrot.slane %v1031, %v1053
      %v1057 = vsel %vm308, %v1021, 0
      %v1060 = vsel %vm308, %v1022, 0
      %v1063 = vsel %vm308, %v1023, 0
      %v1066 = vsel %vm308, %v1024, 0
      %1068 = vmatprep.subr.mxu0 0.0
      %1069 = vmatpush1.msra.mxu0 0.0
      %1070 = vmatprep.subr.mxu0 0.0
      %1071 = vmatpush1.msra.mxu0 0.0
      %1072 = vmatprep.subr.mxu0 0.0
      %1073 = vmatpush1.msra.mxu0 0.0
      %1074 = vmatprep.subr.mxu0 0.0
      %1075 = vmatpush1.msra.mxu0 0.0
      %1076 = vmatprep.subr.mxu0 0.0
      %1077 = vmatpush1.msra.mxu0 0.0
      %1078 = vmatprep.subr.mxu0 0.0
      %1079 = vmatpush1.msra.mxu0 0.0
      %1080 = vmatprep.subr.mxu0 0.0
      %1081 = vmatpush1.msra.mxu0 0.0
      %1082 = vmatprep.subr.mxu0 0.0
      %1083 = vmatpush1.msra.mxu0 0.0
      %1084 = vmatprep.subr.mxu0 0.0
      %1085 = vmatpush1.msra.mxu0 0.0
      %1086 = vmatprep.subr.mxu0 0.0
      %1087 = vmatpush1.msra.mxu0 0.0
      %1088 = vmatprep.subr.mxu0 0.0
      %1089 = vmatpush1.msra.mxu0 0.0
      %1090 = vmatprep.subr.mxu0 0.0
      %1091 = vmatpush1.msra.mxu0 0.0
      %1092 = vmatprep.subr.mxu0 0.0
      %1093 = vmatpush1.msra.mxu0 %v1029
      %1094 = vmatprep.subr.mxu0 0.0
      %1095 = vmatpush1.msra.mxu0 %v1028
      %1096 = vmatprep.subr.mxu0 0.0
      %1097 = vmatpush1.msra.mxu0 %v1027
      %1098 = vmatprep.subr.mxu0 0.0
      %1099 = vmatpush1.msra.mxu0 %v1026
      %1100 = vmatprep.subr.mxu0 0.0
      %1101 = vmatpush2.msra.mxu0 0.0
      %1102 = vmatprep.subr.mxu0 0.0
      %1103 = vmatpush2.msra.mxu0 0.0
      %1104 = vmatprep.subr.mxu0 0.0
      %1105 = vmatpush2.msra.mxu0 0.0
      %1106 = vmatprep.subr.mxu0 0.0
      %1107 = vmatpush2.msra.mxu0 0.0
      %1108 = vmatprep.subr.mxu0 0.0
      %1109 = vmatpush2.msra.mxu0 0.0
      %1110 = vmatprep.subr.mxu0 0.0
      %1111 = vmatpush2.msra.mxu0 0.0
      %1112 = vmatprep.subr.mxu0 0.0
      %1113 = vmatpush2.msra.mxu0 0.0
      %1114 = vmatprep.subr.mxu0 0.0
      %1115 = vmatpush2.msra.mxu0 0.0
      %1116 = vmatprep.subr.mxu0 0.0
      %1117 = vmatpush2.msra.mxu0 0.0
      %1118 = vmatprep.subr.mxu0 0.0
      %1119 = vmatpush2.msra.mxu0 0.0
      %1120 = vmatprep.subr.mxu0 0.0
      %1121 = vmatpush2.msra.mxu0 0.0
      %1122 = vmatprep.subr.mxu0 0.0
      %1123 = vmatpush2.msra.mxu0 0.0
      %1124 = vmatprep.subr.mxu0 0.0
      %1125 = vmatpush2.msra.mxu0 0.0
      %1126 = vmatprep.subr.mxu0 0.0
      %1127 = vmatpush2.msra.mxu0 0.0
      %1128 = vmatprep.subr.mxu0 0.0
      %1129 = vmatpush2.msra.mxu0 0.0
      %1130 = vmatprep.subr.mxu0 0.0
      %1131 = vmatpush2.msra.mxu0 0.0
      %1132 = vmatprep.mubr.f32.mxu0 0.0
      %1133 = vmatmul.mubr.f32.gmra.mxu0 %v1057
      %v1134 = vpop.f32.mrf.mxu0
      %v1135 = vadd.f32 %v1054, %v1134
      %v1136 = vpop.f32.mrf.mxu0
      %1137 = vmatprep.mubr.f32.mxu0 0.0
      %1138 = vmatmul.mubr.f32.gmra.mxu0 %v1060
      %v1139 = vpop.f32.mrf.mxu0
      %v1140 = vadd.f32 %v1054, %v1139
      %v1141 = vpop.f32.mrf.mxu0
      %1142 = vmatprep.mubr.f32.mxu0 0.0
      %1143 = vmatmul.mubr.f32.gmra.mxu0 %v1063
      %v1144 = vpop.f32.mrf.mxu0
      %v1145 = vadd.f32 %v1054, %v1144
      %v1146 = vpop.f32.mrf.mxu0
      %1147 = vmatprep.mubr.f32.mxu0 0.0
      %1148 = vmatmul.mubr.f32.gmra.mxu0 %v1066
      %v1149 = vpop.f32.mrf.mxu0
      %v1150 = vadd.f32 %v1054, %v1149
      %v1151 = vpop.f32.mrf.mxu0
      %1152 = vdwg.mxu0
      %v1153 = vmax.f32 %v1135, 0.0
      %v1154 = vmax.f32 %v1140, 0.0
      %v1155 = vmax.f32 %v1145, 0.0
      %v1156 = vmax.f32 %v1150, 0.0
      %v1158 = vlaneseq
      %v1159 = vshrl.u32 %v1158, 7
      %v1160 = vsub.s32 0, %v1159
      %v1161 = vrot.slane %v1038, %v1160
      %v1166 = vrot.slane %v1153, 7
      %v1167 = vrot.slane %v1154, 7
      %v1168 = vrot.slane %v1155, 7
      %v1172 = vsel %vm428, 0.0, %v1166
      %v1173 = vsel %vm428, 0.0, %v1167
      %v1174 = vsel %vm428, 0.0, %v1168
      %1178 = vrot.lane.b32.xlu0 %v1172, 8
      %v1179 = vpop.permute.xlu0 %1178
      %1180 = vrot.lane.b32.xlu0 %v1173, 8
      %v1181 = vpop.permute.xlu0 %1180
      %1182 = vrot.lane.b32.xlu0 %v1174, 8
      %v1183 = vpop.permute.xlu0 %1182
      %v1187 = vsel %vm449, 0.0, %v1179
      %v1188 = vsel %vm449, 0.0, %v1181
      %v1189 = vsel %vm449, 0.0, %v1183
      %v1190 = vlaneseq
      %v1191 = vshrl.u32 %v1190, 7
      %v1192 = vsub.s32 0, %v1191
      %v1193 = vrot.slane %v1033, %v1192
      %v1194 = vmul.f32 %v450, %v1193
      %v1195 = vmul.f32 %v1187, %v1193
      %v1196 = vmul.f32 %v1188, %v1193
      %v1197 = vmul.f32 %v1189, %v1193
      %v1198 = vadd.f32 %v1161, %v1194
      %v1199 = vadd.f32 %v1161, %v1195
      %v1200 = vadd.f32 %v1161, %v1196
      %v1201 = vadd.f32 %v1161, %v1197
      %v1202 = vlaneseq
      %v1203 = vshrl.u32 %v1202, 7
      %v1204 = vsub.s32 1, %v1203
      %v1205 = vrot.slane %v1033, %v1204
      %v1206 = vmul.f32 %v429, %v1205
      %v1207 = vmul.f32 %v1172, %v1205
      %v1208 = vmul.f32 %v1173, %v1205
      %v1209 = vmul.f32 %v1174, %v1205
      %v1210 = vadd.f32 %v1198, %v1206
      %v1211 = vadd.f32 %v1199, %v1207
      %v1212 = vadd.f32 %v1200, %v1208
      %v1213 = vadd.f32 %v1201, %v1209
      %1214 = vrot.lane.b32.xlu0 %v1172, 120
      %v1215 = vpop.permute.xlu0 %1214
      %1216 = vrot.lane.b32.xlu0 %v1173, 120
      %v1217 = vpop.permute.xlu0 %1216
      %1218 = vrot.lane.b32.xlu0 %v1174, 120
      %v1219 = vpop.permute.xlu0 %1218
      %v1223 = vsel %vm490, %v1215, 0.0
      %v1224 = vsel %vm490, %v1217, 0.0
      %v1225 = vsel %vm490, %v1219, 0.0
      %v1226 = vlaneseq
      %v1227 = vshrl.u32 %v1226, 7
      %v1228 = vsub.s32 2, %v1227
      %v1229 = vrot.slane %v1033, %v1228
      %v1230 = vmul.f32 %v491, %v1229
      %v1231 = vmul.f32 %v1223, %v1229
      %v1232 = vmul.f32 %v1224, %v1229
      %v1233 = vmul.f32 %v1225, %v1229
      %v1234 = vadd.f32 %v1210, %v1230
      %v1235 = vadd.f32 %v1211, %v1231
      %v1236 = vadd.f32 %v1212, %v1232
      %v1237 = vadd.f32 %v1213, %v1233
      %1238 = vrot.lane.b32.xlu0 %v1153, 8
      %v1239 = vpop.permute.xlu0 %1238
      %1240 = vrot.lane.b32.xlu0 %v1154, 8
      %v1241 = vpop.permute.xlu0 %1240
      %1242 = vrot.lane.b32.xlu0 %v1155, 8
      %v1243 = vpop.permute.xlu0 %1242
      %v1247 = vsel %vm449, 0.0, %v1239
      %v1248 = vsel %vm449, 0.0, %v1241
      %v1249 = vsel %vm449, 0.0, %v1243
      %v1250 = vlaneseq
      %v1251 = vshrl.u32 %v1250, 7
      %v1252 = vsub.s32 3, %v1251
      %v1253 = vrot.slane %v1033, %v1252
      %v1254 = vmul.f32 %v519, %v1253
      %v1255 = vmul.f32 %v1247, %v1253
      %v1256 = vmul.f32 %v1248, %v1253
      %v1257 = vmul.f32 %v1249, %v1253
      %v1258 = vadd.f32 %v1234, %v1254
      %v1259 = vadd.f32 %v1235, %v1255
      %v1260 = vadd.f32 %v1236, %v1256
      %v1261 = vadd.f32 %v1237, %v1257
      %v1262 = vlaneseq
      %v1263 = vshrl.u32 %v1262, 7
      %v1264 = vsub.s32 4, %v1263
      %v1265 = vrot.slane %v1033, %v1264
      %v1266 = vmul.f32 %v1265, 0.0
      %v1267 = vmul.f32 %v1153, %v1265
      %v1268 = vmul.f32 %v1154, %v1265
      %v1269 = vmul.f32 %v1155, %v1265
      %v1270 = vadd.f32 %v1258, %v1266
      %v1271 = vadd.f32 %v1259, %v1267
      %v1272 = vadd.f32 %v1260, %v1268
      %v1273 = vadd.f32 %v1261, %v1269
      %1274 = vrot.lane.b32.xlu0 %v1153, 120
      %v1275 = vpop.permute.xlu0 %1274
      %1276 = vrot.lane.b32.xlu0 %v1154, 120
      %v1277 = vpop.permute.xlu0 %1276
      %1278 = vrot.lane.b32.xlu0 %v1155, 120
      %v1279 = vpop.permute.xlu0 %1278
      %v1283 = vsel %vm490, %v1275, 0.0
      %v1284 = vsel %vm490, %v1277, 0.0
      %v1285 = vsel %vm490, %v1279, 0.0
      %v1286 = vlaneseq
      %v1287 = vshrl.u32 %v1286, 7
      %v1288 = vsub.s32 5, %v1287
      %v1289 = vrot.slane %v1033, %v1288
      %v1290 = vmul.f32 %v559, %v1289
      %v1291 = vmul.f32 %v1283, %v1289
      %v1292 = vmul.f32 %v1284, %v1289
      %v1293 = vmul.f32 %v1285, %v1289
      %v1294 = vadd.f32 %v1270, %v1290
      %v1295 = vadd.f32 %v1271, %v1291
      %v1296 = vadd.f32 %v1272, %v1292
      %v1297 = vadd.f32 %v1273, %v1293
      %v1298 = vrot.slane %v1153, 1
      %v1299 = vrot.slane %v1154, 1
      %v1300 = vrot.slane %v1155, 1
      %v1304 = vsel %vm583, %v1298, 0.0
      %v1305 = vsel %vm583, %v1299, 0.0
      %v1306 = vsel %vm583, %v1300, 0.0
      %1310 = vrot.lane.b32.xlu0 %v1304, 8
      %v1311 = vpop.permute.xlu0 %1310
      %1312 = vrot.lane.b32.xlu0 %v1305, 8
      %v1313 = vpop.permute.xlu0 %1312
      %1314 = vrot.lane.b32.xlu0 %v1306, 8
      %v1315 = vpop.permute.xlu0 %1314
      %v1319 = vsel %vm449, 0.0, %v1311
      %v1320 = vsel %vm449, 0.0, %v1313
      %v1321 = vsel %vm449, 0.0, %v1315
      %v1322 = vlaneseq
      %v1323 = vshrl.u32 %v1322, 7
      %v1324 = vsub.s32 6, %v1323
      %v1325 = vrot.slane %v1033, %v1324
      %v1326 = vmul.f32 %v604, %v1325
      %v1327 = vmul.f32 %v1319, %v1325
      %v1328 = vmul.f32 %v1320, %v1325
      %v1329 = vmul.f32 %v1321, %v1325
      %v1330 = vadd.f32 %v1294, %v1326
      %v1331 = vadd.f32 %v1295, %v1327
      %v1332 = vadd.f32 %v1296, %v1328
      %v1333 = vadd.f32 %v1297, %v1329
      %v1334 = vlaneseq
      %v1335 = vshrl.u32 %v1334, 7
      %v1336 = vsub.s32 7, %v1335
      %v1337 = vrot.slane %v1033, %v1336
      %v1338 = vmul.f32 %v584, %v1337
      %v1339 = vmul.f32 %v1304, %v1337
      %v1340 = vmul.f32 %v1305, %v1337
      %v1341 = vmul.f32 %v1306, %v1337
      %v1342 = vadd.f32 %v1330, %v1338
      %v1343 = vadd.f32 %v1331, %v1339
      %v1344 = vadd.f32 %v1332, %v1340
      %v1345 = vadd.f32 %v1333, %v1341
      %1346 = vrot.lane.b32.xlu0 %v1304, 120
      %v1347 = vpop.permute.xlu0 %1346
      %1348 = vrot.lane.b32.xlu0 %v1305, 120
      %v1349 = vpop.permute.xlu0 %1348
      %1350 = vrot.lane.b32.xlu0 %v1306, 120
      %v1351 = vpop.permute.xlu0 %1350
      %v1355 = vsel %vm490, %v1347, 0.0
      %v1356 = vsel %vm490, %v1349, 0.0
      %v1357 = vsel %vm490, %v1351, 0.0
      %v1358 = vlaneseq
      %v1359 = vshrl.u32 %v1358, 7
      %v1360 = vsub.s32 0, %v1359
      %v1361 = vrot.slane %v1034, %v1360
      %v1362 = vmul.f32 %v644, %v1361
      %v1363 = vmul.f32 %v1355, %v1361
      %v1364 = vmul.f32 %v1356, %v1361
      %v1365 = vmul.f32 %v1357, %v1361
      %v1366 = vadd.f32 %v1342, %v1362
      %v1367 = vadd.f32 %v1343, %v1363
      %v1368 = vadd.f32 %v1344, %v1364
      %v1369 = vadd.f32 %v1345, %v1365
      %v1371 = vrot.slane %v1156, 7
      %v1373 = vsel %vm428, 0.0, %v1371
      %1375 = vrot.lane.b32.xlu0 %v1373, 8
      %v1376 = vpop.permute.xlu0 %1375
      %v1378 = vsel %vm449, 0.0, %v1376
      %v1379 = vlaneseq
      %v1380 = vshrl.u32 %v1379, 7
      %v1381 = vsub.s32 1, %v1380
      %v1382 = vrot.slane %v1034, %v1381
      %v1383 = vmul.f32 %v1187, %v1382
      %v1384 = vmul.f32 %v1188, %v1382
      %v1385 = vmul.f32 %v1189, %v1382
      %v1386 = vmul.f32 %v1378, %v1382
      %v1387 = vadd.f32 %v1366, %v1383
      %v1388 = vadd.f32 %v1367, %v1384
      %v1389 = vadd.f32 %v1368, %v1385
      %v1390 = vadd.f32 %v1369, %v1386
      %v1391 = vlaneseq
      %v1392 = vshrl.u32 %v1391, 7
      %v1393 = vsub.s32 2, %v1392
      %v1394 = vrot.slane %v1034, %v1393
      %v1395 = vmul.f32 %v1172, %v1394
      %v1396 = vmul.f32 %v1173, %v1394
      %v1397 = vmul.f32 %v1174, %v1394
      %v1398 = vmul.f32 %v1373, %v1394
      %v1399 = vadd.f32 %v1387, %v1395
      %v1400 = vadd.f32 %v1388, %v1396
      %v1401 = vadd.f32 %v1389, %v1397
      %v1402 = vadd.f32 %v1390, %v1398
      %1403 = vrot.lane.b32.xlu0 %v1373, 120
      %v1404 = vpop.permute.xlu0 %1403
      %v1406 = vsel %vm490, %v1404, 0.0
      %v1407 = vlaneseq
      %v1408 = vshrl.u32 %v1407, 7
      %v1409 = vsub.s32 3, %v1408
      %v1410 = vrot.slane %v1034, %v1409
      %v1411 = vmul.f32 %v1223, %v1410
      %v1412 = vmul.f32 %v1224, %v1410
      %v1413 = vmul.f32 %v1225, %v1410
      %v1414 = vmul.f32 %v1406, %v1410
      %v1415 = vadd.f32 %v1399, %v1411
      %v1416 = vadd.f32 %v1400, %v1412
      %v1417 = vadd.f32 %v1401, %v1413
      %v1418 = vadd.f32 %v1402, %v1414
      %1419 = vrot.lane.b32.xlu0 %v1156, 8
      %v1420 = vpop.permute.xlu0 %1419
      %v1422 = vsel %vm449, 0.0, %v1420
      %v1423 = vlaneseq
      %v1424 = vshrl.u32 %v1423, 7
      %v1425 = vsub.s32 4, %v1424
      %v1426 = vrot.slane %v1034, %v1425
      %v1427 = vmul.f32 %v1247, %v1426
      %v1428 = vmul.f32 %v1248, %v1426
      %v1429 = vmul.f32 %v1249, %v1426
      %v1430 = vmul.f32 %v1422, %v1426
      %v1431 = vadd.f32 %v1415, %v1427
      %v1432 = vadd.f32 %v1416, %v1428
      %v1433 = vadd.f32 %v1417, %v1429
      %v1434 = vadd.f32 %v1418, %v1430
      %v1435 = vlaneseq
      %v1436 = vshrl.u32 %v1435, 7
      %v1437 = vsub.s32 5, %v1436
      %v1438 = vrot.slane %v1034, %v1437
      %v1439 = vmul.f32 %v1153, %v1438
      %v1440 = vmul.f32 %v1154, %v1438
      %v1441 = vmul.f32 %v1155, %v1438
      %v1442 = vmul.f32 %v1156, %v1438
      %v1443 = vadd.f32 %v1431, %v1439
      %v1444 = vadd.f32 %v1432, %v1440
      %v1445 = vadd.f32 %v1433, %v1441
      %v1446 = vadd.f32 %v1434, %v1442
      %1447 = vrot.lane.b32.xlu0 %v1156, 120
      %v1448 = vpop.permute.xlu0 %1447
      %v1450 = vsel %vm490, %v1448, 0.0
      %v1451 = vlaneseq
      %v1452 = vshrl.u32 %v1451, 7
      %v1453 = vsub.s32 6, %v1452
      %v1454 = vrot.slane %v1034, %v1453
      %v1455 = vmul.f32 %v1283, %v1454
      %v1456 = vmul.f32 %v1284, %v1454
      %v1457 = vmul.f32 %v1285, %v1454
      %v1458 = vmul.f32 %v1450, %v1454
      %v1459 = vadd.f32 %v1443, %v1455
      %v1460 = vadd.f32 %v1444, %v1456
      %v1461 = vadd.f32 %v1445, %v1457
      %v1462 = vadd.f32 %v1446, %v1458
      %v1463 = vrot.slane %v1156, 1
      %v1465 = vsel %vm583, %v1463, 0.0
      %1467 = vrot.lane.b32.xlu0 %v1465, 8
      %v1468 = vpop.permute.xlu0 %1467
      %v1470 = vsel %vm449, 0.0, %v1468
      %v1471 = vlaneseq
      %v1472 = vshrl.u32 %v1471, 7
      %v1473 = vsub.s32 7, %v1472
      %v1474 = vrot.slane %v1034, %v1473
      %v1475 = vmul.f32 %v1319, %v1474
      %v1476 = vmul.f32 %v1320, %v1474
      %v1477 = vmul.f32 %v1321, %v1474
      %v1478 = vmul.f32 %v1470, %v1474
      %v1479 = vadd.f32 %v1459, %v1475
      %v1480 = vadd.f32 %v1460, %v1476
      %v1481 = vadd.f32 %v1461, %v1477
      %v1482 = vadd.f32 %v1462, %v1478
      %v1483 = vlaneseq
      %v1484 = vshrl.u32 %v1483, 7
      %v1485 = vsub.s32 0, %v1484
      %v1486 = vrot.slane %v1035, %v1485
      %v1487 = vmul.f32 %v1304, %v1486
      %v1488 = vmul.f32 %v1305, %v1486
      %v1489 = vmul.f32 %v1306, %v1486
      %v1490 = vmul.f32 %v1465, %v1486
      %v1491 = vadd.f32 %v1479, %v1487
      %v1492 = vadd.f32 %v1480, %v1488
      %v1493 = vadd.f32 %v1481, %v1489
      %v1494 = vadd.f32 %v1482, %v1490
      %1495 = vrot.lane.b32.xlu0 %v1465, 120
      %v1496 = vpop.permute.xlu0 %1495
      %v1498 = vsel %vm490, %v1496, 0.0
      %v1499 = vlaneseq
      %v1500 = vshrl.u32 %v1499, 7
      %v1501 = vsub.s32 1, %v1500
      %v1502 = vrot.slane %v1035, %v1501
      %v1503 = vmul.f32 %v1355, %v1502
      %v1504 = vmul.f32 %v1356, %v1502
      %v1505 = vmul.f32 %v1357, %v1502
      %v1506 = vmul.f32 %v1498, %v1502
      %v1507 = vadd.f32 %v1491, %v1503
      %v1508 = vadd.f32 %v1492, %v1504
      %v1509 = vadd.f32 %v1493, %v1505
      %v1510 = vadd.f32 %v1494, %v1506
      %v1511 = vlaneseq
      %v1512 = vshrl.u32 %v1511, 7
      %v1513 = vsub.s32 2, %v1512
      %v1514 = vrot.slane %v1035, %v1513
      %v1515 = vmul.f32 %v1188, %v1514
      %v1516 = vmul.f32 %v1189, %v1514
      %v1517 = vmul.f32 %v1378, %v1514
      %v1518 = vmul.f32 %v450, %v1514
      %v1519 = vadd.f32 %v1507, %v1515
      %v1520 = vadd.f32 %v1508, %v1516
      %v1521 = vadd.f32 %v1509, %v1517
      %v1522 = vadd.f32 %v1510, %v1518
      %v1523 = vlaneseq
      %v1524 = vshrl.u32 %v1523, 7
      %v1525 = vsub.s32 3, %v1524
      %v1526 = vrot.slane %v1035, %v1525
      %v1527 = vmul.f32 %v1173, %v1526
      %v1528 = vmul.f32 %v1174, %v1526
      %v1529 = vmul.f32 %v1373, %v1526
      %v1530 = vmul.f32 %v429, %v1526
      %v1531 = vadd.f32 %v1519, %v1527
      %v1532 = vadd.f32 %v1520, %v1528
      %v1533 = vadd.f32 %v1521, %v1529
      %v1534 = vadd.f32 %v1522, %v1530
      %v1535 = vlaneseq
      %v1536 = vshrl.u32 %v1535, 7
      %v1537 = vsub.s32 4, %v1536
      %v1538 = vrot.slane %v1035, %v1537
      %v1539 = vmul.f32 %v1224, %v1538
      %v1540 = vmul.f32 %v1225, %v1538
      %v1541 = vmul.f32 %v1406, %v1538
      %v1542 = vmul.f32 %v491, %v1538
      %v1543 = vadd.f32 %v1531, %v1539
      %v1544 = vadd.f32 %v1532, %v1540
      %v1545 = vadd.f32 %v1533, %v1541
      %v1546 = vadd.f32 %v1534, %v1542
      %v1547 = vlaneseq
      %v1548 = vshrl.u32 %v1547, 7
      %v1549 = vsub.s32 5, %v1548
      %v1550 = vrot.slane %v1035, %v1549
      %v1551 = vmul.f32 %v1248, %v1550
      %v1552 = vmul.f32 %v1249, %v1550
      %v1553 = vmul.f32 %v1422, %v1550
      %v1554 = vmul.f32 %v519, %v1550
      %v1555 = vadd.f32 %v1543, %v1551
      %v1556 = vadd.f32 %v1544, %v1552
      %v1557 = vadd.f32 %v1545, %v1553
      %v1558 = vadd.f32 %v1546, %v1554
      %v1559 = vlaneseq
      %v1560 = vshrl.u32 %v1559, 7
      %v1561 = vsub.s32 6, %v1560
      %v1562 = vrot.slane %v1035, %v1561
      %v1563 = vmul.f32 %v1154, %v1562
      %v1564 = vmul.f32 %v1155, %v1562
      %v1565 = vmul.f32 %v1156, %v1562
      %v1566 = vmul.f32 %v1562, 0.0
      %v1567 = vadd.f32 %v1555, %v1563
      %v1568 = vadd.f32 %v1556, %v1564
      %v1569 = vadd.f32 %v1557, %v1565
      %v1570 = vadd.f32 %v1558, %v1566
      %v1571 = vlaneseq
      %v1572 = vshrl.u32 %v1571, 7
      %v1573 = vsub.s32 7, %v1572
      %v1574 = vrot.slane %v1035, %v1573
      %v1575 = vmul.f32 %v1284, %v1574
      %v1576 = vmul.f32 %v1285, %v1574
      %v1577 = vmul.f32 %v1450, %v1574
      %v1578 = vmul.f32 %v559, %v1574
      %v1579 = vadd.f32 %v1567, %v1575
      %v1580 = vadd.f32 %v1568, %v1576
      %v1581 = vadd.f32 %v1569, %v1577
      %v1582 = vadd.f32 %v1570, %v1578
      %v1583 = vlaneseq
      %v1584 = vshrl.u32 %v1583, 7
      %v1585 = vsub.s32 0, %v1584
      %v1586 = vrot.slane %v1036, %v1585
      %v1587 = vmul.f32 %v1320, %v1586
      %v1588 = vmul.f32 %v1321, %v1586
      %v1589 = vmul.f32 %v1470, %v1586
      %v1590 = vmul.f32 %v604, %v1586
      %v1591 = vadd.f32 %v1579, %v1587
      %v1592 = vadd.f32 %v1580, %v1588
      %v1593 = vadd.f32 %v1581, %v1589
      %v1594 = vadd.f32 %v1582, %v1590
      %v1595 = vlaneseq
      %v1596 = vshrl.u32 %v1595, 7
      %v1597 = vsub.s32 1, %v1596
      %v1598 = vrot.slane %v1036, %v1597
      %v1599 = vmul.f32 %v1305, %v1598
      %v1600 = vmul.f32 %v1306, %v1598
      %v1601 = vmul.f32 %v1465, %v1598
      %v1602 = vmul.f32 %v584, %v1598
      %v1603 = vadd.f32 %v1591, %v1599
      %v1604 = vadd.f32 %v1592, %v1600
      %v1605 = vadd.f32 %v1593, %v1601
      %v1606 = vadd.f32 %v1594, %v1602
      %v1607 = vlaneseq
      %v1608 = vshrl.u32 %v1607, 7
      %v1609 = vsub.s32 2, %v1608
      %v1610 = vrot.slane %v1036, %v1609
      %v1611 = vmul.f32 %v1356, %v1610
      %v1612 = vmul.f32 %v1357, %v1610
      %v1613 = vmul.f32 %v1498, %v1610
      %v1614 = vmul.f32 %v644, %v1610
      %v1615 = vadd.f32 %v1603, %v1611
      %v1616 = vadd.f32 %v1604, %v1612
      %v1617 = vadd.f32 %v1605, %v1613
      %v1618 = vadd.f32 %v1606, %v1614
      %v1619 = vmax.f32 %v1615, 0.0
      %v1620 = vmax.f32 %v1616, 0.0
      %v1621 = vmax.f32 %v1617, 0.0
      %v1622 = vmax.f32 %v1618, 0.0
      %v1624 = vlaneseq
      %v1625 = vshrl.u32 %v1624, 7
      %v1626 = vsub.s32 0, %v1625
      %v1627 = vrot.slane %v1049, %v1626
      %v1630 = vsel %vm919, %v1619, 0
      %v1633 = vsel %vm919, %v1620, 0
      %v1636 = vsel %vm919, %v1621, 0
      %v1639 = vsel %vm919, %v1622, 0
      %1641 = vmatprep.subr.mxu0 0.0
      %1642 = vmatpush1.msra.mxu0 0.0
      %1643 = vmatprep.subr.mxu0 0.0
      %1644 = vmatpush1.msra.mxu0 0.0
      %1645 = vmatprep.subr.mxu0 0.0
      %1646 = vmatpush1.msra.mxu0 0.0
      %1647 = vmatprep.subr.mxu0 0.0
      %1648 = vmatpush1.msra.mxu0 0.0
      %1649 = vmatprep.subr.mxu0 0.0
      %1650 = vmatpush1.msra.mxu0 0.0
      %1651 = vmatprep.subr.mxu0 0.0
      %1652 = vmatpush1.msra.mxu0 0.0
      %1653 = vmatprep.subr.mxu0 0.0
      %1654 = vmatpush1.msra.mxu0 0.0
      %1655 = vmatprep.subr.mxu0 0.0
      %1656 = vmatpush1.msra.mxu0 0.0
      %1657 = vmatprep.subr.mxu0 0.0
      %1658 = vmatpush1.msra.mxu0 %v1047
      %1659 = vmatprep.subr.mxu0 0.0
      %1660 = vmatpush1.msra.mxu0 %v1046
      %1661 = vmatprep.subr.mxu0 0.0
      %1662 = vmatpush1.msra.mxu0 %v1045
      %1663 = vmatprep.subr.mxu0 0.0
      %1664 = vmatpush1.msra.mxu0 %v1044
      %1665 = vmatprep.subr.mxu0 0.0
      %1666 = vmatpush1.msra.mxu0 %v1043
      %1667 = vmatprep.subr.mxu0 0.0
      %1668 = vmatpush1.msra.mxu0 %v1042
      %1669 = vmatprep.subr.mxu0 0.0
      %1670 = vmatpush1.msra.mxu0 %v1041
      %1671 = vmatprep.subr.mxu0 0.0
      %1672 = vmatpush1.msra.mxu0 %v1040
      %1673 = vmatprep.subr.mxu0 0.0
      %1674 = vmatpush2.msra.mxu0 0.0
      %1675 = vmatprep.subr.mxu0 0.0
      %1676 = vmatpush2.msra.mxu0 0.0
      %1677 = vmatprep.subr.mxu0 0.0
      %1678 = vmatpush2.msra.mxu0 0.0
      %1679 = vmatprep.subr.mxu0 0.0
      %1680 = vmatpush2.msra.mxu0 0.0
      %1681 = vmatprep.subr.mxu0 0.0
      %1682 = vmatpush2.msra.mxu0 0.0
      %1683 = vmatprep.subr.mxu0 0.0
      %1684 = vmatpush2.msra.mxu0 0.0
      %1685 = vmatprep.subr.mxu0 0.0
      %1686 = vmatpush2.msra.mxu0 0.0
      %1687 = vmatprep.subr.mxu0 0.0
      %1688 = vmatpush2.msra.mxu0 0.0
      %1689 = vmatprep.subr.mxu0 0.0
      %1690 = vmatpush2.msra.mxu0 0.0
      %1691 = vmatprep.subr.mxu0 0.0
      %1692 = vmatpush2.msra.mxu0 0.0
      %1693 = vmatprep.subr.mxu0 0.0
      %1694 = vmatpush2.msra.mxu0 0.0
      %1695 = vmatprep.subr.mxu0 0.0
      %1696 = vmatpush2.msra.mxu0 0.0
      %1697 = vmatprep.subr.mxu0 0.0
      %1698 = vmatpush2.msra.mxu0 0.0
      %1699 = vmatprep.subr.mxu0 0.0
      %1700 = vmatpush2.msra.mxu0 0.0
      %1701 = vmatprep.subr.mxu0 0.0
      %1702 = vmatpush2.msra.mxu0 0.0
      %1703 = vmatprep.subr.mxu0 0.0
      %1704 = vmatpush2.msra.mxu0 0.0
      %1705 = vmatprep.mubr.f32.mxu0 0.0
      %1706 = vmatmul.mubr.f32.gmra.mxu0 %v1630
      %v1707 = vpop.f32.mrf.mxu0
      %v1708 = vadd.f32 %v1627, %v1707
      %v1709 = vpop.f32.mrf.mxu0
      %1710 = vmatprep.mubr.f32.mxu0 0.0
      %1711 = vmatmul.mubr.f32.gmra.mxu0 %v1633
      %v1712 = vpop.f32.mrf.mxu0
      %v1713 = vadd.f32 %v1627, %v1712
      %v1714 = vpop.f32.mrf.mxu0
      %1715 = vmatprep.mubr.f32.mxu0 0.0
      %1716 = vmatmul.mubr.f32.gmra.mxu0 %v1636
      %v1717 = vpop.f32.mrf.mxu0
      %v1718 = vadd.f32 %v1627, %v1717
      %v1719 = vpop.f32.mrf.mxu0
      %1720 = vmatprep.mubr.f32.mxu0 0.0
      %1721 = vmatmul.mubr.f32.gmra.mxu0 %v1639
      %v1722 = vpop.f32.mrf.mxu0
      %v1723 = vadd.f32 %v1627, %v1722
      %v1724 = vpop.f32.mrf.mxu0
      %1725 = vdwg.mxu0
      %v1726 = vadd.f32 %v1021, %v1708
      %v1727 = vadd.f32 %v1022, %v1713
      %v1728 = vadd.f32 %v1023, %v1718
      %v1729 = vadd.f32 %v1024, %v1723
      %v1730 = vmax.f32 %v1726, 0.0
      %v1731 = vmax.f32 %v1727, 0.0
      %v1732 = vmax.f32 %v1728, 0.0
      %v1733 = vmax.f32 %v1729, 0.0
      %1734 = vst.msk [vmem:[%s278] sm:$0xff] %vm308, %v1730
      %1735 = vst.msk [vmem:[%s278 + $0x8] sm:$0xff] %vm308, %v1731
      %1736 = vst.msk [vmem:[%s278 + $0x10] sm:$0xff] %vm308, %v1732
      %1737 = vst.msk [vmem:[%s278 + $0x18] sm:$0xff] %vm308, %v1733
      %p1738 = scmp.lt.s32.totalorder %s18, 1
      %s1739 = scalar_select %p1738, %s18, 1
      %s1740 = smul.addr %s1739, 4
      %s1741 = smul.addr %s1740, 8
      %s1742 = scalar_lea.vmem %s7, %s1741
      // Predicated region
      $region49: #{res_stage_pallas.1} parent=47 // pred_check
        %p1743 = pneg %p188
      $region50: #{res_stage_pallas.1} parent=47 // pred_check_branch
        %1745 = sbr.rel (%p1743) target = $region52
      $region51: #{res_stage_pallas.1} parent=47 // pred_region
        _
      $region52: #{res_stage_pallas.1} parent=47 // pred_fallthru
        _
    $region48: #{res_stage_pallas.1} parent=5 // pred_fallthru
      _
    %p1746 = scmp.le.s32.totalorder 2, %s13
    // Predicated region
    $region53: #{res_stage_pallas.1} parent=5 // pred_check
      %p1747 = pneg %p1746
    $region54: #{res_stage_pallas.1} parent=5 // pred_check_branch
      %1749 = sbr.rel (%p1747) target = $region56
    $region55: #{res_stage_pallas.1} parent=5 // pred_region
      %s1750 = ssub.s32 %s13, 2
      // Predicated region
      $region57: #{res_stage_pallas.1} parent=55 // pred_check
        %p1751 = pneg %p194
      $region58: #{res_stage_pallas.1} parent=55 // pred_check_branch
        %1753 = sbr.rel (%p1751) target = $region60
      $region59: #{res_stage_pallas.1} parent=55 // pred_region
        %p1754 = scmp.lt.s32.totalorder %s19, 1
        %s1755 = scalar_select %p1754, %s19, 1
        %s1756 = smul.addr %s1755, 4
        %s1757 = smul.addr %s1756, 8
        %s1758 = scalar_lea.vmem %s7, %s1757
      $region60: #{res_stage_pallas.1} parent=55 // pred_fallthru
        _
    $region56: #{res_stage_pallas.1} parent=5 // pred_fallthru
      _
  $region6: #{res_stage_pallas.1} parent=0 // loop_footer
    %s17 = sadd.s32 1, %s13
  $region7: #{res_stage_pallas.1} parent=0 // loop_footer_branch
    %12 = sbr.rel target = $region3
  $region8: #{res_stage_pallas.1} parent=0 // loop_exit
    _

</llo_original>
